<compile_context>
chip_gen: v6e
topology: v6e:2x2x1
jax: 0.10.0
libtpu: 0.0.40
codegen_flags: <defaults>
</compile_context>

<pallas_src>
import jax
import jax.numpy as jnp
import numpy as np
from jax import lax
from jax.experimental import pallas as pl
from jax.experimental.pallas import tpu as pltpu

# ----------------------------- configuration -----------------------------
# Small shapes consistent with the module's constraints:
#   channels = [int(c * coef) for c in [512, 512, 256]]  with coef = 1/8
#   assert channels[2] * in_samples % latent_dim == 0
B = 2
IN_SAMPLES = 64          # "in_samples"
INPUT_CHANNELS = 4       # "input_channels"
CH_COEF = 1.0 / 8.0
CHANNELS = [int(c * CH_COEF) for c in [512, 512, 256]]   # [64, 64, 32]
LATENT_DIM = 32
FC_DIMS = [1000, 200, 10]                                 # hard-coded in the module
K_POOL = CHANNELS[2] * IN_SAMPLES // LATENT_DIM
assert CHANNELS[2] * IN_SAMPLES % LATENT_DIM == 0, \
    "Latent dim must divide channels[2] * in_samples"
# The matmul-pooling fold below also needs whole channels per pooling window
# (true here since C3 == LATENT_DIM, i.e. g == 1, which also keeps the
# G-fold bf16-exact).
assert CHANNELS[2] % LATENT_DIM == 0
NEG_SLOPE = 0.2

FC1_PAD = 1024           # 1000 -> 1024 (lane-dense)
FC2_PAD = 256            # 200  -> 256  (lane-dense)
WF2_ARG_IDX = 10         # position of wf2 in the kernel argument tuple


def _leaky(x):
    return jnp.where(x > 0, x, NEG_SLOPE * x)


# ------------------------------ Pallas kernel ------------------------------
def _disc_kernel(x_ref, pool_ref,
                 w1_ref, b1_ref, w2_ref, b2_ref, w3_ref, b3_ref,
                 wf1_ref, bf1_ref, wf2_hbm_ref, bf2_ref, wf3_ref, bf3_ref,
                 out_ref,
                 wf2_vmem, wf2_sem):
    # Kick off the dominant weight DMA (wf2: 512 KiB bf16, ~80% of all bytes)
    # immediately so it overlaps the conv chain + pooling + FC1.
    wf2_copy = pltpu.make_async_copy(wf2_hbm_ref, wf2_vmem, wf2_sem)
    wf2_copy.start()

    # Conv chain, carried transposed as (C, B*S): lane axis = B*S = 128 dense.
    # All MXU operands are bf16 with f32 accumulation (single MXU pass each).
    xb = x_ref[...].astype(jnp.bfloat16)                                # (Cin, B*S)
    h = _leaky(jnp.dot(w1_ref[...], xb,
                       preferred_element_type=jnp.float32) + b1_ref[...])
    h = _leaky(jnp.dot(w2_ref[...], h.astype(jnp.bfloat16),
                       preferred_element_type=jnp.float32) + b2_ref[...])
    h = _leaky(jnp.dot(w3_ref[...], h.astype(jnp.bfloat16),
                       preferred_element_type=jnp.float32) + b3_ref[...])
    # h: (C3, B*S) f32

    # Flatten(channel-major) + AvgPool1d == per-batch mean over samples
    # (channel-group fold already baked into wf1 on the host).  Contract over
    # the dense lane axis on the MXU (no in-kernel transpose of h):
    #   (B, B*S) ._{1,1} (C3, B*S) -> (B, C3)
    z = lax.dot_general(pool_ref[...], h, (((1,), (1,)), ((), ())),
                        preferred_element_type=jnp.float32)

    # FC head: bf16 weights used directly from VMEM (no f32 upcast), bf16 lhs,
    # f32 accumulation.  Dims are zero-padded to lane multiples; the final
    # AdaptiveAvgPool1d(1) is folded into wf3/bf3.
    f = _leaky(jnp.dot(z.astype(jnp.bfloat16), wf1_ref[...],
                       preferred_element_type=jnp.float32) + bf1_ref[...])   # (B, 1024)
    wf2_copy.wait()            # wf2 has been landing during the work above
    f = _leaky(jnp.dot(f.astype(jnp.bfloat16), wf2_vmem[...],
                       preferred_element_type=jnp.float32) + bf2_ref[...])   # (B, 256)
    out_ref[...] = jnp.dot(f, wf3_ref[...],
                           preferred_element_type=jnp.float32) + bf3_ref[...]  # (B, 1)


def cccg_discriminator(x, kp):
    """x: (B, S, C_in) float32.  kp: prepared kernel params.  Returns (B, 1)."""
    Bn, S, Cin = x.shape
    # Host-side layout prep: (B,S,Cin) -> (Cin, B*S) so the kernel's conv-chain
    # activations are lane-dense (last axis = B*S = 128).  Tiny (2 KiB) op.
    x_t = jnp.transpose(x.reshape(Bn * S, Cin))

    args = (x_t, kp["pool"],
            kp["w1"], kp["b1"], kp["w2"], kp["b2"], kp["w3"], kp["b3"],
            kp["wf1"], kp["bf1"], kp["wf2"], kp["bf2"], kp["wf3"], kp["bf3"])

    in_specs = []
    for idx, a in enumerate(args):
        if idx == WF2_ARG_IDX:
            # wf2 stays in HBM; the kernel overlaps its DMA with the conv chain.
            in_specs.append(pl.BlockSpec(memory_space=pl.ANY))
        else:
            in_specs.append(pl.BlockSpec(a.shape, lambda i: (0, 0)))
    out_specs = pl.BlockSpec((Bn, 1), lambda i: (0, 0))

    c0, c1, c2 = CHANNELS
    flops = 2 * (Bn * S * (Cin * c0 + c0 * c1 + c1 * c2)          # conv chain
                 + Bn * (Bn * S) * c2                             # pooling contraction
                 + Bn * (c2 * FC1_PAD + FC1_PAD * FC2_PAD + FC2_PAD * 1))
    bytes_accessed = sum(int(np.prod(a.shape)) * a.dtype.itemsize for a in args) + Bn * 4

    return pl.pallas_call(
        _disc_kernel,
        out_shape=jax.ShapeDtypeStruct((Bn, 1), jnp.float32),
        grid=(1,),                              # single fused step
        in_specs=in_specs,
        out_specs=out_specs,
        scratch_shapes=[pltpu.VMEM((FC1_PAD, FC2_PAD), jnp.bfloat16),  # wf2 landing buffer
                        pltpu.SemaphoreType.DMA],
        compiler_params=pltpu.CompilerParams(dimension_semantics=("arbitrary",)),
        cost_estimate=pl.CostEstimate(flops=int(flops), transcendentals=0,
                                      bytes_accessed=int(bytes_accessed)),
    )(*args)


# --------------------------- parameter construction -------------------------
def init_params(key):
    """Deterministic synthetic f32 master weights (shapes match the module)."""
    ks = jax.random.split(key, 8)
    c0, c1, c2 = CHANNELS

    def w(k, shape, scale):
        return jax.random.normal(k, shape, jnp.float32) * scale

    # Conv2d 1x1 weights stored as (in_ch, out_ch); Linear weights as (in, out).
    params = dict(
        w1=w(ks[0], (INPUT_CHANNELS, c0), 0.1), b1=jnp.full((1, c0), 0.01, jnp.float32),
        w2=w(ks[1], (c0, c1), 0.05),            b2=jnp.full((1, c1), 0.01, jnp.float32),
        w3=w(ks[2], (c1, c2), 0.05),            b3=jnp.full((1, c2), 0.01, jnp.float32),
        wf1=w(ks[3], (LATENT_DIM, FC_DIMS[0]), 0.1),
        bf1=jnp.full((1, FC_DIMS[0]), 0.01, jnp.float32),
        wf2=w(ks[4], (FC_DIMS[0], FC_DIMS[1]), 0.05),
        bf2=jnp.full((1, FC_DIMS[1]), 0.01, jnp.float32),
        wf3=w(ks[5], (FC_DIMS[1], FC_DIMS[2]), 0.05),
        bf3=jnp.full((1, FC_DIMS[2]), 0.01, jnp.float32),
    )
    return params


def prepare_params(params, batch, samples):
    """Returns (reference_params, kernel_params).

    Both the reference and the kernel use the SAME bf16-quantized matmul
    weights and the same bf16-operand / f32-accumulate matmul policy, so the
    numerical check stays tight.  The kernel params additionally get the exact
    folding / padding / layout transforms described at the top of the file.
    """
    c0, c1, c2 = CHANNELS
    L = LATENT_DIM
    g = c2 // L

    # bf16-quantize every matmul weight once (MXU operands are bf16 everywhere).
    w1_q = params["w1"].astype(jnp.bfloat16)
    w2_q = params["w2"].astype(jnp.bfloat16)
    w3_q = params["w3"].astype(jnp.bfloat16)
    wf1_q = params["wf1"].astype(jnp.bfloat16)
    wf2_q = params["wf2"].astype(jnp.bfloat16)

    ref_params = dict(
        w1=w1_q, b1=params["b1"], w2=w2_q, b2=params["b2"], w3=w3_q, b3=params["b3"],
        wf1=wf1_q, bf1=params["bf1"], wf2=wf2_q, bf2=params["bf2"],
        wf3=params["wf3"], bf3=params["bf3"])

    # 1) AvgPool1d over the channel-major flatten == (mean over samples) @ G,
    #    with G grouping C3//L consecutive channels.  Here C3 == L so G == I
    #    and baking G into wf1 is bf16-exact.
    G = jnp.repeat(jnp.eye(L, dtype=jnp.float32), g, axis=0) / g          # (C3, L)
    wf1_eff = G @ wf1_q.astype(jnp.float32)                               # (C3, 1000)
    # 2) Fold AdaptiveAvgPool1d(1) into the last Linear (exact, kept f32).
    wf3_eff = params["wf3"].mean(axis=1, keepdims=True)                   # (200, 1)
    bf3_eff = params["bf3"].mean(axis=1, keepdims=True)                   # (1, 1)
    # 3) Zero-pad FC dims to lane-dense multiples of 128 (exact).
    wf1_k = jnp.zeros((c2, FC1_PAD), jnp.float32).at[:, :FC_DIMS[0]].set(wf1_eff)
    bf1_k = jnp.zeros((1, FC1_PAD), jnp.float32).at[:, :FC_DIMS[0]].set(params["bf1"])
    wf2_k = jnp.zeros((FC1_PAD, FC2_PAD), jnp.bfloat16).at[:FC_DIMS[0], :FC_DIMS[1]].set(wf2_q)
    bf2_k = jnp.zeros((1, FC2_PAD), jnp.float32).at[:, :FC_DIMS[1]].set(params["bf2"])
    wf3_k = jnp.zeros((FC2_PAD, 1), jnp.float32).at[:FC_DIMS[1], :].set(wf3_eff)
    # 4) Per-batch mean-over-samples as a (B, B*S) pooling matrix contracted on
    #    the lane axis inside the kernel.  TODO(synk): for large B replace this
    #    O(B^2*S) matrix with a per-batch (S->1) reduction to stay linear in B.
    pool = jnp.kron(jnp.eye(batch, dtype=jnp.float32),
                    jnp.full((1, samples), 1.0 / samples, jnp.float32))   # (B, B*S)

    kernel_params = dict(
        pool=pool,
        # Transposed conv weights / column biases for the (C, B*S) layout.
        w1=jnp.transpose(w1_q), b1=params["b1"].reshape(c0, 1),
        w2=jnp.transpose(w2_q), b2=params["b2"].reshape(c1, 1),
        w3=jnp.transpose(w3_q), b3=params["b3"].reshape(c2, 1),
        wf1=wf1_k.astype(jnp.bfloat16), bf1=bf1_k,
        wf2=wf2_k, bf2=bf2_k,
        wf3=wf3_k, bf3=bf3_eff)
    return ref_params, kernel_params


# ------------------------------ pure-JAX reference ---------------------------
def reference(x, p):
    """Faithful re-implementation of the PyTorch forward (1x1 convs == per-sample
    linears), using the same bf16-operand / f32-accumulate matmul policy as the
    kernel so the comparison is apples-to-apples."""
    Bn, S, Cin = x.shape
    h = x.reshape(Bn * S, Cin).astype(jnp.bfloat16)
    h = _leaky(jnp.dot(h, p["w1"], preferred_element_type=jnp.float32) + p["b1"])
    h = _leaky(jnp.dot(h.astype(jnp.bfloat16), p["w2"],
                       preferred_element_type=jnp.float32) + p["b2"])
    h = _leaky(jnp.dot(h.astype(jnp.bfloat16), p["w3"],
                       preferred_element_type=jnp.float32) + p["b3"])
    h = h.reshape(Bn, S, CHANNELS[2])                                     # (B, S, C3)
    flat = jnp.transpose(h, (0, 2, 1)).reshape(Bn, -1)                    # NCHW flatten
    z = flat.reshape(Bn, LATENT_DIM, K_POOL).mean(-1)                     # AvgPool1d
    f = _leaky(jnp.dot(z.astype(jnp.bfloat16), p["wf1"],
                       preferred_element_type=jnp.float32) + p["bf1"])
    f = _leaky(jnp.dot(f.astype(jnp.bfloat16), p["wf2"],
                       preferred_element_type=jnp.float32) + p["bf2"])
    f = jnp.dot(f, p["wf3"], preferred_element_type=jnp.float32) + p["bf3"]
    return f.mean(-1, keepdims=True)                                      # AdaptiveAvgPool1d(1)


# ------------------------------------ main ----------------------------------
if __name__ == "__main__":
    key = jax.random.PRNGKey(0)
    kx, kp_key = jax.random.split(key)
    x = jax.random.normal(kx, (B, IN_SAMPLES, INPUT_CHANNELS), jnp.float32)

    params = init_params(kp_key)
    ref_params, kernel_params = prepare_params(params, B, IN_SAMPLES)

    out = jax.block_until_ready(cccg_discriminator(x, kernel_params))
    ref = jax.block_until_ready(reference(x, ref_params))

    assert out.shape == (B, 1)
    np.testing.assert_allclose(np.asarray(out), np.asarray(ref), rtol=2e-3, atol=2e-4)

    print("KERNEL_OK")
</pallas_src>

<mosaic_0001>
module attributes {stable_mosaic.version = 11 : i64} {
  func.func @_disc_kernel(%arg0: i32, %arg1: memref<4x128xf32, #tpu.memory_space<vmem>>, %arg2: memref<2x128xf32, #tpu.memory_space<vmem>>, %arg3: memref<64x4xbf16, #tpu.memory_space<vmem>>, %arg4: memref<64x1xf32, #tpu.memory_space<vmem>>, %arg5: memref<64x64xbf16, #tpu.memory_space<vmem>>, %arg6: memref<64x1xf32, #tpu.memory_space<vmem>>, %arg7: memref<32x64xbf16, #tpu.memory_space<vmem>>, %arg8: memref<32x1xf32, #tpu.memory_space<vmem>>, %arg9: memref<32x1024xbf16, #tpu.memory_space<vmem>>, %arg10: memref<1x1024xf32, #tpu.memory_space<vmem>>, %arg11: memref<1024x256xbf16, #tpu.memory_space<any>>, %arg12: memref<1x256xf32, #tpu.memory_space<vmem>>, %arg13: memref<256x1xf32, #tpu.memory_space<vmem>>, %arg14: memref<1x1xf32, #tpu.memory_space<vmem>>, %arg15: memref<2x1xf32, #tpu.memory_space<vmem>>, %arg16: memref<1024x256xbf16, #tpu.memory_space<vmem>>, %arg17: memref<!tpu.dma_semaphore, #tpu.memory_space<semaphore_mem>>) attributes {dimension_semantics = [#tpu.dimension_semantics<arbitrary>], iteration_bounds = array<i64: 1>, scalar_prefetch = 0 : i64, scratch_operands = 2 : i64, tpu.core_type = #tpu.core_type<tc>, window_params = [{pipeline_mode = #tpu.pipeline_mode<synchronous>, transform_indices = @transform_0, window_bounds = array<i64: 4, 128>}, {pipeline_mode = #tpu.pipeline_mode<synchronous>, transform_indices = @transform_1, window_bounds = array<i64: 2, 128>}, {pipeline_mode = #tpu.pipeline_mode<synchronous>, transform_indices = @transform_2, window_bounds = array<i64: 64, 4>}, {pipeline_mode = #tpu.pipeline_mode<synchronous>, transform_indices = @transform_3, window_bounds = array<i64: 64, 1>}, {pipeline_mode = #tpu.pipeline_mode<synchronous>, transform_indices = @transform_4, window_bounds = array<i64: 64, 64>}, {pipeline_mode = #tpu.pipeline_mode<synchronous>, transform_indices = @transform_5, window_bounds = array<i64: 64, 1>}, {pipeline_mode = #tpu.pipeline_mode<synchronous>, transform_indices = @transform_6, window_bounds = array<i64: 32, 64>}, {pipeline_mode = #tpu.pipeline_mode<synchronous>, transform_indices = @transform_7, window_bounds = array<i64: 32, 1>}, {pipeline_mode = #tpu.pipeline_mode<synchronous>, transform_indices = @transform_8, window_bounds = array<i64: 32, 1024>}, {pipeline_mode = #tpu.pipeline_mode<synchronous>, transform_indices = @transform_9, window_bounds = array<i64: 1, 1024>}, {}, {pipeline_mode = #tpu.pipeline_mode<synchronous>, transform_indices = @transform_11, window_bounds = array<i64: 1, 256>}, {pipeline_mode = #tpu.pipeline_mode<synchronous>, transform_indices = @transform_12, window_bounds = array<i64: 256, 1>}, {pipeline_mode = #tpu.pipeline_mode<synchronous>, transform_indices = @transform_13, window_bounds = array<i64: 1, 1>}, {pipeline_mode = #tpu.pipeline_mode<synchronous>, transform_indices = @transform_14, window_bounds = array<i64: 2, 1>}]} {
    tpu.enqueue_dma source(%arg11 : memref<1024x256xbf16, #tpu.memory_space<any>>) target(%arg16 : memref<1024x256xbf16, #tpu.memory_space<vmem>>) target_semaphore(%arg17 : memref<!tpu.dma_semaphore, #tpu.memory_space<semaphore_mem>>)
    %c0 = arith.constant 0 : index
    %c0_0 = arith.constant 0 : index
    %0 = vector.load %arg1[%c0, %c0_0] : memref<4x128xf32, #tpu.memory_space<vmem>>, vector<4x128xf32>
    %1 = arith.truncf %0 : vector<4x128xf32> to vector<4x128xbf16>
    %c0_1 = arith.constant 0 : index
    %c0_2 = arith.constant 0 : index
    %2 = vector.load %arg3[%c0_1, %c0_2] : memref<64x4xbf16, #tpu.memory_space<vmem>>, vector<64x4xbf16>
    %cst = arith.constant dense<0.000000e+00> : vector<64x128xf32>
    %3 = tpu.matmul %2, %1, %cst {dimension_numbers = #tpu.dot_dimension_numbers<[1], [0], [0], [1], [0, 0, 1, 1], [], []>} : vector<64x4xbf16>, vector<4x128xbf16>, vector<64x128xf32> -> vector<64x128xf32>
    %c0_3 = arith.constant 0 : index
    %c0_4 = arith.constant 0 : index
    %4 = vector.load %arg4[%c0_3, %c0_4] : memref<64x1xf32, #tpu.memory_space<vmem>>, vector<64x1xf32>
    %5 = vector.broadcast %4 : vector<64x1xf32> to vector<64x128xf32>
    %6 = arith.addf %3, %5 : vector<64x128xf32>
    %cst_5 = arith.constant 0.000000e+00 : f32
    %7 = vector.broadcast %cst_5 : f32 to vector<64x128xf32>
    %8 = arith.cmpf ogt, %6, %7 : vector<64x128xf32>
    %cst_6 = arith.constant 2.000000e-01 : f32
    %9 = vector.broadcast %cst_6 : f32 to vector<64x128xf32>
    %10 = arith.mulf %9, %6 : vector<64x128xf32>
    %11 = arith.select %8, %6, %10 : vector<64x128xi1>, vector<64x128xf32>
    %c0_7 = arith.constant 0 : index
    %c0_8 = arith.constant 0 : index
    %12 = vector.load %arg5[%c0_7, %c0_8] : memref<64x64xbf16, #tpu.memory_space<vmem>>, vector<64x64xbf16>
    %13 = arith.truncf %11 : vector<64x128xf32> to vector<64x128xbf16>
    %cst_9 = arith.constant dense<0.000000e+00> : vector<64x128xf32>
    %14 = tpu.matmul %12, %13, %cst_9 {dimension_numbers = #tpu.dot_dimension_numbers<[1], [0], [0], [1], [0, 0, 1, 1], [], []>} : vector<64x64xbf16>, vector<64x128xbf16>, vector<64x128xf32> -> vector<64x128xf32>
    %c0_10 = arith.constant 0 : index
    %c0_11 = arith.constant 0 : index
    %15 = vector.load %arg6[%c0_10, %c0_11] : memref<64x1xf32, #tpu.memory_space<vmem>>, vector<64x1xf32>
    %16 = vector.broadcast %15 : vector<64x1xf32> to vector<64x128xf32>
    %17 = arith.addf %14, %16 : vector<64x128xf32>
    %cst_12 = arith.constant 0.000000e+00 : f32
    %18 = vector.broadcast %cst_12 : f32 to vector<64x128xf32>
    %19 = arith.cmpf ogt, %17, %18 : vector<64x128xf32>
    %cst_13 = arith.constant 2.000000e-01 : f32
    %20 = vector.broadcast %cst_13 : f32 to vector<64x128xf32>
    %21 = arith.mulf %20, %17 : vector<64x128xf32>
    %22 = arith.select %19, %17, %21 : vector<64x128xi1>, vector<64x128xf32>
    %c0_14 = arith.constant 0 : index
    %c0_15 = arith.constant 0 : index
    %23 = vector.load %arg7[%c0_14, %c0_15] : memref<32x64xbf16, #tpu.memory_space<vmem>>, vector<32x64xbf16>
    %24 = arith.truncf %22 : vector<64x128xf32> to vector<64x128xbf16>
    %cst_16 = arith.constant dense<0.000000e+00> : vector<32x128xf32>
    %25 = tpu.matmul %23, %24, %cst_16 {dimension_numbers = #tpu.dot_dimension_numbers<[1], [0], [0], [1], [0, 0, 1, 1], [], []>} : vector<32x64xbf16>, vector<64x128xbf16>, vector<32x128xf32> -> vector<32x128xf32>
    %c0_17 = arith.constant 0 : index
    %c0_18 = arith.constant 0 : index
    %26 = vector.load %arg8[%c0_17, %c0_18] : memref<32x1xf32, #tpu.memory_space<vmem>>, vector<32x1xf32>
    %27 = vector.broadcast %26 : vector<32x1xf32> to vector<32x128xf32>
    %28 = arith.addf %25, %27 : vector<32x128xf32>
    %cst_19 = arith.constant 0.000000e+00 : f32
    %29 = vector.broadcast %cst_19 : f32 to vector<32x128xf32>
    %30 = arith.cmpf ogt, %28, %29 : vector<32x128xf32>
    %cst_20 = arith.constant 2.000000e-01 : f32
    %31 = vector.broadcast %cst_20 : f32 to vector<32x128xf32>
    %32 = arith.mulf %31, %28 : vector<32x128xf32>
    %33 = arith.select %30, %28, %32 : vector<32x128xi1>, vector<32x128xf32>
    %c0_21 = arith.constant 0 : index
    %c0_22 = arith.constant 0 : index
    %34 = vector.load %arg2[%c0_21, %c0_22] : memref<2x128xf32, #tpu.memory_space<vmem>>, vector<2x128xf32>
    %cst_23 = arith.constant dense<0.000000e+00> : vector<2x32xf32>
    %35 = tpu.matmul %34, %33, %cst_23 {dimension_numbers = #tpu.dot_dimension_numbers<[1], [1], [0], [0], [0, 0, 1, 0], [], []>} : vector<2x128xf32>, vector<32x128xf32>, vector<2x32xf32> -> vector<2x32xf32>
    %36 = arith.truncf %35 : vector<2x32xf32> to vector<2x32xbf16>
    %c0_24 = arith.constant 0 : index
    %c0_25 = arith.constant 0 : index
    %37 = vector.load %arg9[%c0_24, %c0_25] : memref<32x1024xbf16, #tpu.memory_space<vmem>>, vector<32x1024xbf16>
    %cst_26 = arith.constant dense<0.000000e+00> : vector<2x1024xf32>
    %38 = tpu.matmul %36, %37, %cst_26 {dimension_numbers = #tpu.dot_dimension_numbers<[1], [0], [0], [1], [0, 0, 1, 1], [], []>} : vector<2x32xbf16>, vector<32x1024xbf16>, vector<2x1024xf32> -> vector<2x1024xf32>
    %c0_27 = arith.constant 0 : index
    %c0_28 = arith.constant 0 : index
    %39 = vector.load %arg10[%c0_27, %c0_28] : memref<1x1024xf32, #tpu.memory_space<vmem>>, vector<1x1024xf32>
    %40 = vector.broadcast %39 : vector<1x1024xf32> to vector<2x1024xf32>
    %41 = arith.addf %38, %40 : vector<2x1024xf32>
    %cst_29 = arith.constant 0.000000e+00 : f32
    %42 = vector.broadcast %cst_29 : f32 to vector<2x1024xf32>
    %43 = arith.cmpf ogt, %41, %42 : vector<2x1024xf32>
    %cst_30 = arith.constant 2.000000e-01 : f32
    %44 = vector.broadcast %cst_30 : f32 to vector<2x1024xf32>
    %45 = arith.mulf %44, %41 : vector<2x1024xf32>
    %46 = arith.select %43, %41, %45 : vector<2x1024xi1>, vector<2x1024xf32>
    tpu.wait_dma2 semaphore(%arg17 : memref<!tpu.dma_semaphore, #tpu.memory_space<semaphore_mem>>) src(%arg11 : memref<1024x256xbf16, #tpu.memory_space<any>>) dst(%arg16 : memref<1024x256xbf16, #tpu.memory_space<vmem>>)
    %47 = arith.truncf %46 : vector<2x1024xf32> to vector<2x1024xbf16>
    %c0_31 = arith.constant 0 : index
    %c0_32 = arith.constant 0 : index
    %48 = vector.load %arg16[%c0_31, %c0_32] : memref<1024x256xbf16, #tpu.memory_space<vmem>>, vector<1024x256xbf16>
    %cst_33 = arith.constant dense<0.000000e+00> : vector<2x256xf32>
    %49 = tpu.matmul %47, %48, %cst_33 {dimension_numbers = #tpu.dot_dimension_numbers<[1], [0], [0], [1], [0, 0, 1, 1], [], []>} : vector<2x1024xbf16>, vector<1024x256xbf16>, vector<2x256xf32> -> vector<2x256xf32>
    %c0_34 = arith.constant 0 : index
    %c0_35 = arith.constant 0 : index
    %50 = vector.load %arg12[%c0_34, %c0_35] : memref<1x256xf32, #tpu.memory_space<vmem>>, vector<1x256xf32>
    %51 = vector.broadcast %50 : vector<1x256xf32> to vector<2x256xf32>
    %52 = arith.addf %49, %51 : vector<2x256xf32>
    %cst_36 = arith.constant 0.000000e+00 : f32
    %53 = vector.broadcast %cst_36 : f32 to vector<2x256xf32>
    %54 = arith.cmpf ogt, %52, %53 : vector<2x256xf32>
    %cst_37 = arith.constant 2.000000e-01 : f32
    %55 = vector.broadcast %cst_37 : f32 to vector<2x256xf32>
    %56 = arith.mulf %55, %52 : vector<2x256xf32>
    %57 = arith.select %54, %52, %56 : vector<2x256xi1>, vector<2x256xf32>
    %c0_38 = arith.constant 0 : index
    %c0_39 = arith.constant 0 : index
    %58 = vector.load %arg13[%c0_38, %c0_39] : memref<256x1xf32, #tpu.memory_space<vmem>>, vector<256x1xf32>
    %cst_40 = arith.constant dense<0.000000e+00> : vector<2x1xf32>
    %59 = tpu.matmul %57, %58, %cst_40 {dimension_numbers = #tpu.dot_dimension_numbers<[1], [0], [0], [1], [0, 0, 1, 1], [], []>} : vector<2x256xf32>, vector<256x1xf32>, vector<2x1xf32> -> vector<2x1xf32>
    %c0_41 = arith.constant 0 : index
    %c0_42 = arith.constant 0 : index
    %60 = vector.load %arg14[%c0_41, %c0_42] : memref<1x1xf32, #tpu.memory_space<vmem>>, vector<1x1xf32>
    %61 = vector.broadcast %60 : vector<1x1xf32> to vector<2x1xf32>
    %62 = arith.addf %59, %61 : vector<2x1xf32>
    %c0_43 = arith.constant 0 : index
    %c0_44 = arith.constant 0 : index
    %63 = vector.load %arg15[%c0_43, %c0_44] : memref<2x1xf32, #tpu.memory_space<vmem>>, vector<2x1xf32>
    tpu.vector_store %arg15[%c0_43, %c0_44], %62 {strides = array<i32>} : memref<2x1xf32, #tpu.memory_space<vmem>>, vector<2x1xf32>,
    return
  }
  func.func @transform_0(%arg0: i32) -> (i32, i32) {
    %c0_i32 = arith.constant 0 : i32
    %c0_i32_0 = arith.constant 0 : i32
    %c0_i32_1 = arith.constant 0 : i32
    return %c0_i32, %c0_i32_0 : i32, i32
  }
  func.func @transform_1(%arg0: i32) -> (i32, i32) {
    %c0_i32 = arith.constant 0 : i32
    %c0_i32_0 = arith.constant 0 : i32
    %c0_i32_1 = arith.constant 0 : i32
    return %c0_i32, %c0_i32_0 : i32, i32
  }
  func.func @transform_2(%arg0: i32) -> (i32, i32) {
    %c0_i32 = arith.constant 0 : i32
    %c0_i32_0 = arith.constant 0 : i32
    %c0_i32_1 = arith.constant 0 : i32
    return %c0_i32, %c0_i32_0 : i32, i32
  }
  func.func @transform_3(%arg0: i32) -> (i32, i32) {
    %c0_i32 = arith.constant 0 : i32
    %c0_i32_0 = arith.constant 0 : i32
    %c0_i32_1 = arith.constant 0 : i32
    return %c0_i32, %c0_i32_0 : i32, i32
  }
  func.func @transform_4(%arg0: i32) -> (i32, i32) {
    %c0_i32 = arith.constant 0 : i32
    %c0_i32_0 = arith.constant 0 : i32
    %c0_i32_1 = arith.constant 0 : i32
    return %c0_i32, %c0_i32_0 : i32, i32
  }
  func.func @transform_5(%arg0: i32) -> (i32, i32) {
    %c0_i32 = arith.constant 0 : i32
    %c0_i32_0 = arith.constant 0 : i32
    %c0_i32_1 = arith.constant 0 : i32
    return %c0_i32, %c0_i32_0 : i32, i32
  }
  func.func @transform_6(%arg0: i32) -> (i32, i32) {
    %c0_i32 = arith.constant 0 : i32
    %c0_i32_0 = arith.constant 0 : i32
    %c0_i32_1 = arith.constant 0 : i32
    return %c0_i32, %c0_i32_0 : i32, i32
  }
  func.func @transform_7(%arg0: i32) -> (i32, i32) {
    %c0_i32 = arith.constant 0 : i32
    %c0_i32_0 = arith.constant 0 : i32
    %c0_i32_1 = arith.constant 0 : i32
    return %c0_i32, %c0_i32_0 : i32, i32
  }
  func.func @transform_8(%arg0: i32) -> (i32, i32) {
    %c0_i32 = arith.constant 0 : i32
    %c0_i32_0 = arith.constant 0 : i32
    %c0_i32_1 = arith.constant 0 : i32
    return %c0_i32, %c0_i32_0 : i32, i32
  }
  func.func @transform_9(%arg0: i32) -> (i32, i32) {
    %c0_i32 = arith.constant 0 : i32
    %c0_i32_0 = arith.constant 0 : i32
    %c0_i32_1 = arith.constant 0 : i32
    return %c0_i32, %c0_i32_0 : i32, i32
  }
  func.func @transform_11(%arg0: i32) -> (i32, i32) {
    %c0_i32 = arith.constant 0 : i32
    %c0_i32_0 = arith.constant 0 : i32
    %c0_i32_1 = arith.constant 0 : i32
    return %c0_i32, %c0_i32_0 : i32, i32
  }
  func.func @transform_12(%arg0: i32) -> (i32, i32) {
    %c0_i32 = arith.constant 0 : i32
    %c0_i32_0 = arith.constant 0 : i32
    %c0_i32_1 = arith.constant 0 : i32
    return %c0_i32, %c0_i32_0 : i32, i32
  }
  func.func @transform_13(%arg0: i32) -> (i32, i32) {
    %c0_i32 = arith.constant 0 : i32
    %c0_i32_0 = arith.constant 0 : i32
    %c0_i32_1 = arith.constant 0 : i32
    return %c0_i32, %c0_i32_0 : i32, i32
  }
  func.func @transform_14(%arg0: i32) -> (i32, i32) {
    %c0_i32 = arith.constant 0 : i32
    %c0_i32_0 = arith.constant 0 : i32
    %c0_i32_1 = arith.constant 0 : i32
    return %c0_i32, %c0_i32_0 : i32, i32
  }
}

</mosaic_0001>

<llo_original>
// kernel: tpu_custom_call.1
$region0: #{tpu_custom_call.1}
  #allocation0 [shape = 'u32[]', space=smem, size = 0x4, offset = 0x4, fixed_abs, tag = 'smem constant byte address 0x4 - core index']
  #allocation1 [shape = 'u32[144,128]{1,0:T(1,128)}', space=vmem, size = 0x12000, scoped, tag = 'internal scratch']
  #allocation2 [shape = 'bf16[1024,256]{1,0:T(8,128)(2,1)}', space=vmem, size = 0x80000, scoped, tag = 'scratch operand']
  #allocation3 [shape = 's32[1]{0}', space=sflag, size = 0x4, scoped, tag = 'scratch operand']
  #allocation4 [shape = 'f32[1,1]{1,0:T(1,128)S(1)}', space=vmem, size = 0x200, scoped, tag = 'scoped memory for tpu_custom_call.1']
  #allocation5 [shape = 's32[]', space=sflag, size = 0x4, offset = 0, fixed_abs, tag = 'sflag constant byte address 0x0 - dummy sync flag']
  #allocation6 [shape = 's32[]', space=sflag, size = 0x4, offset = 0, fixed_abs, tag = 'sflag constant byte address 0x0 - dummy sync flag']
  #allocation7 [shape = 'u32[]', space=smem, size = 0x4, offset = 0x44, fixed_abs, tag = 'smem constant byte address 0x44 - assertion arg 0']
  #allocation8 [shape = 'u32[]', space=smem, size = 0x4, offset = 0x48, fixed_abs, tag = 'smem constant byte address 0x48 - assertion arg 1']
  %s0 = inlined_call_operand.vmem [shape: f32[4,128], index: 0, kind: input, shape index: {}]
  %s1 = inlined_call_operand.vmem [shape: f32[2,128], index: 1, kind: input, shape index: {}]
  %s2 = inlined_call_operand.vmem [shape: bf16[64,4], index: 2, kind: input, shape index: {}]
  %s3 = inlined_call_operand.vmem [shape: f32[64,1], index: 3, kind: input, shape index: {}]
  %s4 = inlined_call_operand.vmem [shape: bf16[64,64], index: 4, kind: input, shape index: {}]
  %s5 = inlined_call_operand.vmem [shape: f32[64,1], index: 5, kind: input, shape index: {}]
  %s6 = inlined_call_operand.vmem [shape: bf16[32,64], index: 6, kind: input, shape index: {}]
  %s7 = inlined_call_operand.vmem [shape: f32[32,1], index: 7, kind: input, shape index: {}]
  %s8 = inlined_call_operand.vmem [shape: bf16[32,1024], index: 8, kind: input, shape index: {}]
  %s9 = inlined_call_operand.vmem [shape: f32[1,1024], index: 9, kind: input, shape index: {}]
  %s10 = inlined_call_operand.hbm [shape: bf16[1024,256], index: 10, kind: input, shape index: {}]
  %s11 = inlined_call_operand.vmem [shape: f32[1,256], index: 11, kind: input, shape index: {}]
  %s12 = inlined_call_operand.vmem [shape: f32[256,1], index: 12, kind: input, shape index: {}]
  %s13 = inlined_call_operand.<no memory space> [shape: f32[1,1], index: 13, kind: input, shape index: {}]
  %s14 = inlined_call_operand.vmem [shape: f32[2,1], index: 14, kind: output, shape index: {}]
  %s15 = sld [smem:[#allocation0]]
  $region66: #{tpu_custom_call.1} parent=0
    _
  %s17 = ssub.s32 1, %s15
  %s18 = scalar_select 0, %s17, %s15
  %v19 = vstv %s13
  %20 = vst [vmem:[#allocation4] sm:$0x1] %v19
  // Predicated region
  $region2: #{tpu_custom_call.1} parent=0 // pred_check
    _
  $region3: #{tpu_custom_call.1} parent=0 // pred_check_branch
    %22 = sbr.rel (0) target = $region5
  $region4: #{tpu_custom_call.1} parent=0 // pred_region
    _
  $region5: #{tpu_custom_call.1} parent=0 // pred_fallthru
    _
  // Predicated region
  $region6: #{tpu_custom_call.1} parent=0 // pred_check
    _
  $region7: #{tpu_custom_call.1} parent=0 // pred_check_branch
    %24 = sbr.rel (0) target = $region9
  $region8: #{tpu_custom_call.1} parent=0 // pred_region
    _
  $region9: #{tpu_custom_call.1} parent=0 // pred_fallthru
    _
  // Predicated region
  $region10: #{tpu_custom_call.1} parent=0 // pred_check
    _
  $region11: #{tpu_custom_call.1} parent=0 // pred_check_branch
    %26 = sbr.rel (0) target = $region13
  $region12: #{tpu_custom_call.1} parent=0 // pred_region
    _
  $region13: #{tpu_custom_call.1} parent=0 // pred_fallthru
    _
  // Predicated region
  $region14: #{tpu_custom_call.1} parent=0 // pred_check
    _
  $region15: #{tpu_custom_call.1} parent=0 // pred_check_branch
    %28 = sbr.rel (0) target = $region17
  $region16: #{tpu_custom_call.1} parent=0 // pred_region
    _
  $region17: #{tpu_custom_call.1} parent=0 // pred_fallthru
    _
  // Predicated region
  $region18: #{tpu_custom_call.1} parent=0 // pred_check
    _
  $region19: #{tpu_custom_call.1} parent=0 // pred_check_branch
    %30 = sbr.rel (0) target = $region21
  $region20: #{tpu_custom_call.1} parent=0 // pred_region
    _
  $region21: #{tpu_custom_call.1} parent=0 // pred_fallthru
    _
  // Predicated region
  $region22: #{tpu_custom_call.1} parent=0 // pred_check
    _
  $region23: #{tpu_custom_call.1} parent=0 // pred_check_branch
    %32 = sbr.rel (0) target = $region25
  $region24: #{tpu_custom_call.1} parent=0 // pred_region
    _
  $region25: #{tpu_custom_call.1} parent=0 // pred_fallthru
    _
  // Predicated region
  $region26: #{tpu_custom_call.1} parent=0 // pred_check
    _
  $region27: #{tpu_custom_call.1} parent=0 // pred_check_branch
    %34 = sbr.rel (0) target = $region29
  $region28: #{tpu_custom_call.1} parent=0 // pred_region
    _
  $region29: #{tpu_custom_call.1} parent=0 // pred_fallthru
    _
  // Predicated region
  $region30: #{tpu_custom_call.1} parent=0 // pred_check
    _
  $region31: #{tpu_custom_call.1} parent=0 // pred_check_branch
    %36 = sbr.rel (0) target = $region33
  $region32: #{tpu_custom_call.1} parent=0 // pred_region
    _
  $region33: #{tpu_custom_call.1} parent=0 // pred_fallthru
    _
  // Predicated region
  $region34: #{tpu_custom_call.1} parent=0 // pred_check
    _
  $region35: #{tpu_custom_call.1} parent=0 // pred_check_branch
    %38 = sbr.rel (0) target = $region37
  $region36: #{tpu_custom_call.1} parent=0 // pred_region
    _
  $region37: #{tpu_custom_call.1} parent=0 // pred_fallthru
    _
  // Predicated region
  $region38: #{tpu_custom_call.1} parent=0 // pred_check
    _
  $region39: #{tpu_custom_call.1} parent=0 // pred_check_branch
    %40 = sbr.rel (0) target = $region41
  $region40: #{tpu_custom_call.1} parent=0 // pred_region
    _
  $region41: #{tpu_custom_call.1} parent=0 // pred_fallthru
    _
  // Predicated region
  $region42: #{tpu_custom_call.1} parent=0 // pred_check
    _
  $region43: #{tpu_custom_call.1} parent=0 // pred_check_branch
    %42 = sbr.rel (0) target = $region45
  $region44: #{tpu_custom_call.1} parent=0 // pred_region
    _
  $region45: #{tpu_custom_call.1} parent=0 // pred_fallthru
    _
  // Predicated region
  $region46: #{tpu_custom_call.1} parent=0 // pred_check
    _
  $region47: #{tpu_custom_call.1} parent=0 // pred_check_branch
    %44 = sbr.rel (0) target = $region49
  $region48: #{tpu_custom_call.1} parent=0 // pred_region
    _
  $region49: #{tpu_custom_call.1} parent=0 // pred_fallthru
    _
  // Predicated region
  $region50: #{tpu_custom_call.1} parent=0 // pred_check
    _
  $region51: #{tpu_custom_call.1} parent=0 // pred_check_branch
    %46 = sbr.rel (0) target = $region53
  $region52: #{tpu_custom_call.1} parent=0 // pred_region
    _
  $region53: #{tpu_custom_call.1} parent=0 // pred_fallthru
    _
  // Predicated region
  $region54: #{tpu_custom_call.1} parent=0 // pred_check
    _
  $region55: #{tpu_custom_call.1} parent=0 // pred_check_branch
    %49 = sbr.rel target = $region57
  $region56: #{tpu_custom_call.1} parent=0 // pred_region
    %50 = sst [smem:[#allocation7]] [#allocation6]
    %51 = sst [smem:[#allocation8]] [#allocation5]
  $region57: #{tpu_custom_call.1} parent=0 // pred_fallthru
    _
  %53 = shalt.err (0)
  %s55 = sshll.u32 [#allocation2], 4
  %s56 = int_to_ptr.vmem [resolvable:$true] %s55
  %58 = dma.hbm_to_vmem [thread:$0]  %s10, 16384, %s56, [#allocation3]
  %v59 = vld [vmem:[%s0] sm:$0xf]
  %v60 = vpack.c.bf16 %v59, %v59
  %v61 = vld [vmem:[%s2] sm:$0xf]
  %v62 = vld [vmem:[%s2 + $0x4] sm:$0xf]
  %v63 = vld [vmem:[%s2 + $0x8] sm:$0xf]
  %v64 = vld [vmem:[%s2 + $0xc] sm:$0xf]
  %v65 = vld [vmem:[%s2 + $0x10] sm:$0xf]
  %v66 = vld [vmem:[%s2 + $0x14] sm:$0xf]
  %v67 = vld [vmem:[%s2 + $0x18] sm:$0xf]
  %v68 = vld [vmem:[%s2 + $0x1c] sm:$0xf]
  %v69 = vld [vmem:[%s3] sm:$0xff]
  %v70 = vld [vmem:[%s3 + $0x8] sm:$0xff]
  %v71 = vld [vmem:[%s3 + $0x10] sm:$0xff]
  %v72 = vld [vmem:[%s3 + $0x18] sm:$0xff]
  %v73 = vld [vmem:[%s3 + $0x20] sm:$0xff]
  %v74 = vld [vmem:[%s3 + $0x28] sm:$0xff]
  %v75 = vld [vmem:[%s3 + $0x30] sm:$0xff]
  %v76 = vld [vmem:[%s3 + $0x38] sm:$0xff]
  %78 = vset.pattern.permute.xlu0 0
  %79 = vperm.xlu0 %78, %v69
  %v80 = vpop.permute.xlu0 %79
  %83 = vset.pattern.permute.xlu0 0
  %84 = vperm.xlu0 %83, %v70
  %v85 = vpop.permute.xlu0 %84
  %88 = vset.pattern.permute.xlu0 0
  %89 = vperm.xlu0 %88, %v71
  %v90 = vpop.permute.xlu0 %89
  %93 = vset.pattern.permute.xlu0 0
  %94 = vperm.xlu0 %93, %v72
  %v95 = vpop.permute.xlu0 %94
  %98 = vset.pattern.permute.xlu0 0
  %99 = vperm.xlu0 %98, %v73
  %v100 = vpop.permute.xlu0 %99
  %103 = vset.pattern.permute.xlu0 0
  %104 = vperm.xlu0 %103, %v74
  %v105 = vpop.permute.xlu0 %104
  %108 = vset.pattern.permute.xlu0 0
  %109 = vperm.xlu0 %108, %v75
  %v110 = vpop.permute.xlu0 %109
  %113 = vset.pattern.permute.xlu0 0
  %114 = vperm.xlu0 %113, %v76
  %v115 = vpop.permute.xlu0 %114
  %v125 = vunpack.c.l.b16 %v61
  %v126 = vunpack.c.l.b16 %v62
  %v127 = vunpack.c.l.b16 %v63
  %v128 = vunpack.c.l.b16 %v64
  %v129 = vunpack.c.l.b16 %v65
  %v130 = vunpack.c.l.b16 %v66
  %v131 = vunpack.c.l.b16 %v67
  %v132 = vunpack.c.l.b16 %v68
  %v133 = vpack.c.b16 %v126, %v125
  %v134 = vpack.c.b16 %v128, %v127
  %v135 = vpack.c.b16 %v130, %v129
  %v136 = vpack.c.b16 %v132, %v131
  %vm137 = vcmask 31744
  %v139 = vsel %vm137, %v133, 0
  %v142 = vsel %vm137, %v134, 0
  %v145 = vsel %vm137, %v135, 0
  %v148 = vsel %vm137, %v136, 0
  %vm150 = vcmask 1041408
  %v152 = vsel %vm150, %v60, 0
  %154 = vmatprep.subr.bf16.mxu0 0
  %155 = vmatpush1.bf16.msra.mxu0 0
  %156 = vmatprep.subr.bf16.mxu0 0
  %157 = vmatpush1.bf16.msra.mxu0 0
  %158 = vmatprep.subr.bf16.mxu0 0
  %159 = vmatpush1.bf16.msra.mxu0 0
  %160 = vmatprep.subr.bf16.mxu0 0
  %161 = vmatpush1.bf16.msra.mxu0 0
  %162 = vmatprep.subr.bf16.mxu0 0
  %163 = vmatpush1.bf16.msra.mxu0 0
  %164 = vmatprep.subr.bf16.mxu0 0
  %165 = vmatpush1.bf16.msra.mxu0 0
  %166 = vmatprep.subr.bf16.mxu0 0
  %167 = vmatpush1.bf16.msra.mxu0 0
  %168 = vmatprep.subr.bf16.mxu0 0
  %169 = vmatpush1.bf16.msra.mxu0 %v152
  %170 = vmatprep.subr.bf16.mxu0 0
  %171 = vmatpush2.bf16.msra.mxu0 0
  %172 = vmatprep.subr.bf16.mxu0 0
  %173 = vmatpush2.bf16.msra.mxu0 0
  %174 = vmatprep.subr.bf16.mxu0 0
  %175 = vmatpush2.bf16.msra.mxu0 0
  %176 = vmatprep.subr.bf16.mxu0 0
  %177 = vmatpush2.bf16.msra.mxu0 0
  %178 = vmatprep.subr.bf16.mxu0 0
  %179 = vmatpush2.bf16.msra.mxu0 0
  %180 = vmatprep.subr.bf16.mxu0 0
  %181 = vmatpush2.bf16.msra.mxu0 0
  %182 = vmatprep.subr.bf16.mxu0 0
  %183 = vmatpush2.bf16.msra.mxu0 0
  %184 = vmatprep.subr.bf16.mxu0 0
  %185 = vmatpush2.bf16.msra.mxu0 0
  %186 = vmatprep.mubr.bf16.mxu0 0
  %187 = vmatmul.mubr.bf16.gmra.mxu0 %v139
  %v188 = vpop.f32.mrf.mxu0
  %v189 = vadd.f32 %v80, %v188
  %v190 = vpop.f32.mrf.mxu0
  %v191 = vpop.f32.mrf.mxu0
  %v192 = vadd.f32 %v85, %v191
  %v193 = vpop.f32.mrf.mxu0
  %194 = vmatprep.mubr.bf16.mxu0 0
  %195 = vmatmul.mubr.bf16.gmra.mxu0 %v142
  %v196 = vpop.f32.mrf.mxu0
  %v197 = vadd.f32 %v90, %v196
  %v198 = vpop.f32.mrf.mxu0
  %v199 = vpop.f32.mrf.mxu0
  %v200 = vadd.f32 %v95, %v199
  %v201 = vpop.f32.mrf.mxu0
  %202 = vmatprep.mubr.bf16.mxu0 0
  %203 = vmatmul.mubr.bf16.gmra.mxu0 %v145
  %v204 = vpop.f32.mrf.mxu0
  %v205 = vadd.f32 %v100, %v204
  %v206 = vpop.f32.mrf.mxu0
  %v207 = vpop.f32.mrf.mxu0
  %v208 = vadd.f32 %v105, %v207
  %v209 = vpop.f32.mrf.mxu0
  %210 = vmatprep.mubr.bf16.mxu0 0
  %211 = vmatmul.mubr.bf16.gmra.mxu0 %v148
  %v212 = vpop.f32.mrf.mxu0
  %v213 = vadd.f32 %v110, %v212
  %v214 = vpop.f32.mrf.mxu0
  %v215 = vpop.f32.mrf.mxu0
  %v216 = vadd.f32 %v115, %v215
  %v217 = vpop.f32.mrf.mxu0
  %218 = vdwg.mxu0
  %vm219 = vcmp.gt.f32.partialorder %v189, 0.0
  %vm220 = vcmp.gt.f32.partialorder %v192, 0.0
  %vm221 = vcmp.gt.f32.partialorder %v197, 0.0
  %vm222 = vcmp.gt.f32.partialorder %v200, 0.0
  %vm223 = vcmp.gt.f32.partialorder %v205, 0.0
  %vm224 = vcmp.gt.f32.partialorder %v208, 0.0
  %vm225 = vcmp.gt.f32.partialorder %v213, 0.0
  %vm226 = vcmp.gt.f32.partialorder %v216, 0.0
  %v227 = vmul.f32 %v189, 0.2
  %v228 = vmul.f32 %v192, 0.2
  %v229 = vmul.f32 %v197, 0.2
  %v230 = vmul.f32 %v200, 0.2
  %v231 = vmul.f32 %v205, 0.2
  %v232 = vmul.f32 %v208, 0.2
  %v233 = vmul.f32 %v213, 0.2
  %v234 = vmul.f32 %v216, 0.2
  %v235 = vsel %vm219, %v189, %v227
  %v236 = vsel %vm220, %v192, %v228
  %v237 = vsel %vm221, %v197, %v229
  %v238 = vsel %vm222, %v200, %v230
  %v239 = vsel %vm223, %v205, %v231
  %v240 = vsel %vm224, %v208, %v232
  %v241 = vsel %vm225, %v213, %v233
  %v242 = vsel %vm226, %v216, %v234
  %v243 = vld [vmem:[%s4] sm:$0xf]
  %v244 = vld [vmem:[%s4 + $0x4] sm:$0xf]
  %v245 = vld [vmem:[%s4 + $0x8] sm:$0xf]
  %v246 = vld [vmem:[%s4 + $0xc] sm:$0xf]
  %v247 = vld [vmem:[%s4 + $0x10] sm:$0xf]
  %v248 = vld [vmem:[%s4 + $0x14] sm:$0xf]
  %v249 = vld [vmem:[%s4 + $0x18] sm:$0xf]
  %v250 = vld [vmem:[%s4 + $0x1c] sm:$0xf]
  %v251 = vpack.c.bf16 %v236, %v235
  %v252 = vpack.c.bf16 %v238, %v237
  %v253 = vpack.c.bf16 %v240, %v239
  %v254 = vpack.c.bf16 %v242, %v241
  %v255 = vld [vmem:[%s5] sm:$0xff]
  %v256 = vld [vmem:[%s5 + $0x8] sm:$0xff]
  %v257 = vld [vmem:[%s5 + $0x10] sm:$0xff]
  %v258 = vld [vmem:[%s5 + $0x18] sm:$0xff]
  %v259 = vld [vmem:[%s5 + $0x20] sm:$0xff]
  %v260 = vld [vmem:[%s5 + $0x28] sm:$0xff]
  %v261 = vld [vmem:[%s5 + $0x30] sm:$0xff]
  %v262 = vld [vmem:[%s5 + $0x38] sm:$0xff]
  %264 = vset.pattern.permute.xlu0 0
  %265 = vperm.xlu0 %264, %v255
  %v266 = vpop.permute.xlu0 %265
  %269 = vset.pattern.permute.xlu0 0
  %270 = vperm.xlu0 %269, %v256
  %v271 = vpop.permute.xlu0 %270
  %274 = vset.pattern.permute.xlu0 0
  %275 = vperm.xlu0 %274, %v257
  %v276 = vpop.permute.xlu0 %275
  %279 = vset.pattern.permute.xlu0 0
  %280 = vperm.xlu0 %279, %v258
  %v281 = vpop.permute.xlu0 %280
  %284 = vset.pattern.permute.xlu0 0
  %285 = vperm.xlu0 %284, %v259
  %v286 = vpop.permute.xlu0 %285
  %289 = vset.pattern.permute.xlu0 0
  %290 = vperm.xlu0 %289, %v260
  %v291 = vpop.permute.xlu0 %290
  %294 = vset.pattern.permute.xlu0 0
  %295 = vperm.xlu0 %294, %v261
  %v296 = vpop.permute.xlu0 %295
  %299 = vset.pattern.permute.xlu0 0
  %300 = vperm.xlu0 %299, %v262
  %v301 = vpop.permute.xlu0 %300
  %v311 = vunpack.c.l.b16 %v243
  %v312 = vunpack.c.l.b16 %v244
  %v313 = vunpack.c.l.b16 %v245
  %v314 = vunpack.c.l.b16 %v246
  %v315 = vunpack.c.l.b16 %v247
  %v316 = vunpack.c.l.b16 %v248
  %v317 = vunpack.c.l.b16 %v249
  %v318 = vunpack.c.l.b16 %v250
  %v319 = vpack.c.b16 %v312, %v311
  %v320 = vpack.c.b16 %v314, %v313
  %v321 = vpack.c.b16 %v316, %v315
  %v322 = vpack.c.b16 %v318, %v317
  %vm323 = vcmask 523264
  %v325 = vsel %vm323, %v319, 0
  %v328 = vsel %vm323, %v320, 0
  %v331 = vsel %vm323, %v321, 0
  %v334 = vsel %vm323, %v322, 0
  %336 = vmatprep.subr.bf16.mxu0 0
  %337 = vmatpush1.bf16.msra.mxu0 0
  %338 = vmatprep.subr.bf16.mxu0 0
  %339 = vmatpush1.bf16.msra.mxu0 0
  %340 = vmatprep.subr.bf16.mxu0 0
  %341 = vmatpush1.bf16.msra.mxu0 0
  %342 = vmatprep.subr.bf16.mxu0 0
  %343 = vmatpush1.bf16.msra.mxu0 0
  %344 = vmatprep.subr.bf16.mxu0 0
  %345 = vmatpush1.bf16.msra.mxu0 %v254
  %346 = vmatprep.subr.bf16.mxu0 0
  %347 = vmatpush1.bf16.msra.mxu0 %v253
  %348 = vmatprep.subr.bf16.mxu0 0
  %349 = vmatpush1.bf16.msra.mxu0 %v252
  %350 = vmatprep.subr.bf16.mxu0 0
  %351 = vmatpush1.bf16.msra.mxu0 %v251
  %352 = vmatprep.subr.bf16.mxu0 0
  %353 = vmatpush2.bf16.msra.mxu0 0
  %354 = vmatprep.subr.bf16.mxu0 0
  %355 = vmatpush2.bf16.msra.mxu0 0
  %356 = vmatprep.subr.bf16.mxu0 0
  %357 = vmatpush2.bf16.msra.mxu0 0
  %358 = vmatprep.subr.bf16.mxu0 0
  %359 = vmatpush2.bf16.msra.mxu0 0
  %360 = vmatprep.subr.bf16.mxu0 0
  %361 = vmatpush2.bf16.msra.mxu0 0
  %362 = vmatprep.subr.bf16.mxu0 0
  %363 = vmatpush2.bf16.msra.mxu0 0
  %364 = vmatprep.subr.bf16.mxu0 0
  %365 = vmatpush2.bf16.msra.mxu0 0
  %366 = vmatprep.subr.bf16.mxu0 0
  %367 = vmatpush2.bf16.msra.mxu0 0
  %368 = vmatprep.mubr.bf16.mxu0 0
  %369 = vmatmul.mubr.bf16.gmra.mxu0 %v325
  %v370 = vpop.f32.mrf.mxu0
  %v371 = vadd.f32 %v266, %v370
  %v372 = vpop.f32.mrf.mxu0
  %v373 = vpop.f32.mrf.mxu0
  %v374 = vadd.f32 %v271, %v373
  %v375 = vpop.f32.mrf.mxu0
  %376 = vmatprep.mubr.bf16.mxu0 0
  %377 = vmatmul.mubr.bf16.gmra.mxu0 %v328
  %v378 = vpop.f32.mrf.mxu0
  %v379 = vadd.f32 %v276, %v378
  %v380 = vpop.f32.mrf.mxu0
  %v381 = vpop.f32.mrf.mxu0
  %v382 = vadd.f32 %v281, %v381
  %v383 = vpop.f32.mrf.mxu0
  %384 = vmatprep.mubr.bf16.mxu0 0
  %385 = vmatmul.mubr.bf16.gmra.mxu0 %v331
  %v386 = vpop.f32.mrf.mxu0
  %v387 = vadd.f32 %v286, %v386
  %v388 = vpop.f32.mrf.mxu0
  %v389 = vpop.f32.mrf.mxu0
  %v390 = vadd.f32 %v291, %v389
  %v391 = vpop.f32.mrf.mxu0
  %392 = vmatprep.mubr.bf16.mxu0 0
  %393 = vmatmul.mubr.bf16.gmra.mxu0 %v334
  %v394 = vpop.f32.mrf.mxu0
  %v395 = vadd.f32 %v296, %v394
  %v396 = vpop.f32.mrf.mxu0
  %v397 = vpop.f32.mrf.mxu0
  %v398 = vadd.f32 %v301, %v397
  %v399 = vpop.f32.mrf.mxu0
  %400 = vdwg.mxu0
  %vm401 = vcmp.gt.f32.partialorder %v371, 0.0
  %vm402 = vcmp.gt.f32.partialorder %v374, 0.0
  %vm403 = vcmp.gt.f32.partialorder %v379, 0.0
  %vm404 = vcmp.gt.f32.partialorder %v382, 0.0
  %vm405 = vcmp.gt.f32.partialorder %v387, 0.0
  %vm406 = vcmp.gt.f32.partialorder %v390, 0.0
  %vm407 = vcmp.gt.f32.partialorder %v395, 0.0
  %vm408 = vcmp.gt.f32.partialorder %v398, 0.0
  %v409 = vmul.f32 %v371, 0.2
  %v410 = vmul.f32 %v374, 0.2
  %v411 = vmul.f32 %v379, 0.2
  %v412 = vmul.f32 %v382, 0.2
  %v413 = vmul.f32 %v387, 0.2
  %v414 = vmul.f32 %v390, 0.2
  %v415 = vmul.f32 %v395, 0.2
  %v416 = vmul.f32 %v398, 0.2
  %v417 = vsel %vm401, %v371, %v409
  %v418 = vsel %vm402, %v374, %v410
  %v419 = vsel %vm403, %v379, %v411
  %v420 = vsel %vm404, %v382, %v412
  %v421 = vsel %vm405, %v387, %v413
  %v422 = vsel %vm406, %v390, %v414
  %v423 = vsel %vm407, %v395, %v415
  %v424 = vsel %vm408, %v398, %v416
  %v425 = vld [vmem:[%s6] sm:$0xf]
  %v426 = vld [vmem:[%s6 + $0x4] sm:$0xf]
  %v427 = vld [vmem:[%s6 + $0x8] sm:$0xf]
  %v428 = vld [vmem:[%s6 + $0xc] sm:$0xf]
  %v429 = vpack.c.bf16 %v418, %v417
  %v430 = vpack.c.bf16 %v420, %v419
  %v431 = vpack.c.bf16 %v422, %v421
  %v432 = vpack.c.bf16 %v424, %v423
  %v433 = vld [vmem:[%s7] sm:$0xff]
  %v434 = vld [vmem:[%s7 + $0x8] sm:$0xff]
  %v435 = vld [vmem:[%s7 + $0x10] sm:$0xff]
  %v436 = vld [vmem:[%s7 + $0x18] sm:$0xff]
  %438 = vset.pattern.permute.xlu0 0
  %439 = vperm.xlu0 %438, %v433
  %v440 = vpop.permute.xlu0 %439
  %443 = vset.pattern.permute.xlu0 0
  %444 = vperm.xlu0 %443, %v434
  %v445 = vpop.permute.xlu0 %444
  %448 = vset.pattern.permute.xlu0 0
  %449 = vperm.xlu0 %448, %v435
  %v450 = vpop.permute.xlu0 %449
  %453 = vset.pattern.permute.xlu0 0
  %454 = vperm.xlu0 %453, %v436
  %v455 = vpop.permute.xlu0 %454
  %v461 = vunpack.c.l.b16 %v425
  %v462 = vunpack.c.l.b16 %v426
  %v463 = vunpack.c.l.b16 %v427
  %v464 = vunpack.c.l.b16 %v428
  %v465 = vpack.c.b16 %v462, %v461
  %v466 = vpack.c.b16 %v464, %v463
  %v468 = vsel %vm323, %v465, 0
  %v471 = vsel %vm323, %v466, 0
  %473 = vmatprep.subr.bf16.mxu0 0
  %474 = vmatpush1.bf16.msra.mxu0 0
  %475 = vmatprep.subr.bf16.mxu0 0
  %476 = vmatpush1.bf16.msra.mxu0 0
  %477 = vmatprep.subr.bf16.mxu0 0
  %478 = vmatpush1.bf16.msra.mxu0 0
  %479 = vmatprep.subr.bf16.mxu0 0
  %480 = vmatpush1.bf16.msra.mxu0 0
  %481 = vmatprep.subr.bf16.mxu0 0
  %482 = vmatpush1.bf16.msra.mxu0 %v432
  %483 = vmatprep.subr.bf16.mxu0 0
  %484 = vmatpush1.bf16.msra.mxu0 %v431
  %485 = vmatprep.subr.bf16.mxu0 0
  %486 = vmatpush1.bf16.msra.mxu0 %v430
  %487 = vmatprep.subr.bf16.mxu0 0
  %488 = vmatpush1.bf16.msra.mxu0 %v429
  %489 = vmatprep.subr.bf16.mxu0 0
  %490 = vmatpush2.bf16.msra.mxu0 0
  %491 = vmatprep.subr.bf16.mxu0 0
  %492 = vmatpush2.bf16.msra.mxu0 0
  %493 = vmatprep.subr.bf16.mxu0 0
  %494 = vmatpush2.bf16.msra.mxu0 0
  %495 = vmatprep.subr.bf16.mxu0 0
  %496 = vmatpush2.bf16.msra.mxu0 0
  %497 = vmatprep.subr.bf16.mxu0 0
  %498 = vmatpush2.bf16.msra.mxu0 0
  %499 = vmatprep.subr.bf16.mxu0 0
  %500 = vmatpush2.bf16.msra.mxu0 0
  %501 = vmatprep.subr.bf16.mxu0 0
  %502 = vmatpush2.bf16.msra.mxu0 0
  %503 = vmatprep.subr.bf16.mxu0 0
  %504 = vmatpush2.bf16.msra.mxu0 0
  %505 = vmatprep.mubr.bf16.mxu0 0
  %506 = vmatmul.mubr.bf16.gmra.mxu0 %v468
  %v507 = vpop.f32.mrf.mxu0
  %v508 = vadd.f32 %v440, %v507
  %v509 = vpop.f32.mrf.mxu0
  %v510 = vpop.f32.mrf.mxu0
  %v511 = vadd.f32 %v445, %v510
  %v512 = vpop.f32.mrf.mxu0
  %513 = vmatprep.mubr.bf16.mxu0 0
  %514 = vmatmul.mubr.bf16.gmra.mxu0 %v471
  %v515 = vpop.f32.mrf.mxu0
  %v516 = vadd.f32 %v450, %v515
  %v517 = vpop.f32.mrf.mxu0
  %v518 = vpop.f32.mrf.mxu0
  %v519 = vadd.f32 %v455, %v518
  %v520 = vpop.f32.mrf.mxu0
  %521 = vdwg.mxu0
  %vm522 = vcmp.gt.f32.partialorder %v508, 0.0
  %vm523 = vcmp.gt.f32.partialorder %v511, 0.0
  %vm524 = vcmp.gt.f32.partialorder %v516, 0.0
  %vm525 = vcmp.gt.f32.partialorder %v519, 0.0
  %v526 = vmul.f32 %v508, 0.2
  %v527 = vmul.f32 %v511, 0.2
  %v528 = vmul.f32 %v516, 0.2
  %v529 = vmul.f32 %v519, 0.2
  %v530 = vsel %vm522, %v508, %v526
  %v531 = vsel %vm523, %v511, %v527
  %v532 = vsel %vm524, %v516, %v528
  %v533 = vsel %vm525, %v519, %v529
  %v534 = vld [vmem:[%s1] sm:$0x3]
  %535 = vmatprep.subr.mxu0 0.0
  %536 = vmatpush1.xpose.msra.mxu0 0.0
  %537 = vmatprep.subr.mxu0 0.0
  %538 = vmatpush1.xpose.msra.mxu0 0.0
  %539 = vmatprep.subr.mxu0 0.0
  %540 = vmatpush1.xpose.msra.mxu0 0.0
  %541 = vmatprep.subr.mxu0 0.0
  %542 = vmatpush1.xpose.msra.mxu0 0.0
  %543 = vmatprep.subr.mxu0 0.0
  %544 = vmatpush1.xpose.msra.mxu0 0.0
  %545 = vmatprep.subr.mxu0 0.0
  %546 = vmatpush1.xpose.msra.mxu0 0.0
  %547 = vmatprep.subr.mxu0 0.0
  %548 = vmatpush1.xpose.msra.mxu0 0.0
  %549 = vmatprep.subr.mxu0 0.0
  %550 = vmatpush1.xpose.msra.mxu0 0.0
  %551 = vmatprep.subr.mxu0 0.0
  %552 = vmatpush1.xpose.msra.mxu0 0.0
  %553 = vmatprep.subr.mxu0 0.0
  %554 = vmatpush1.xpose.msra.mxu0 0.0
  %555 = vmatprep.subr.mxu0 0.0
  %556 = vmatpush1.xpose.msra.mxu0 0.0
  %557 = vmatprep.subr.mxu0 0.0
  %558 = vmatpush1.xpose.msra.mxu0 0.0
  %559 = vmatprep.subr.mxu0 0.0
  %560 = vmatpush1.xpose.msra.mxu0 %v533
  %561 = vmatprep.subr.mxu0 0.0
  %562 = vmatpush1.xpose.msra.mxu0 %v532
  %563 = vmatprep.subr.mxu0 0.0
  %564 = vmatpush1.xpose.msra.mxu0 %v531
  %565 = vmatprep.subr.mxu0 0.0
  %566 = vmatpush1.xpose.msra.mxu0 %v530
  %567 = vmatprep.subr.mxu0 0.0
  %568 = vmatpush2.xpose.msra.mxu0 0.0
  %569 = vmatprep.subr.mxu0 0.0
  %570 = vmatpush2.xpose.msra.mxu0 0.0
  %571 = vmatprep.subr.mxu0 0.0
  %572 = vmatpush2.xpose.msra.mxu0 0.0
  %573 = vmatprep.subr.mxu0 0.0
  %574 = vmatpush2.xpose.msra.mxu0 0.0
  %575 = vmatprep.subr.mxu0 0.0
  %576 = vmatpush2.xpose.msra.mxu0 0.0
  %577 = vmatprep.subr.mxu0 0.0
  %578 = vmatpush2.xpose.msra.mxu0 0.0
  %579 = vmatprep.subr.mxu0 0.0
  %580 = vmatpush2.xpose.msra.mxu0 0.0
  %581 = vmatprep.subr.mxu0 0.0
  %582 = vmatpush2.xpose.msra.mxu0 0.0
  %583 = vmatprep.subr.mxu0 0.0
  %584 = vmatpush2.xpose.msra.mxu0 0.0
  %585 = vmatprep.subr.mxu0 0.0
  %586 = vmatpush2.xpose.msra.mxu0 0.0
  %587 = vmatprep.subr.mxu0 0.0
  %588 = vmatpush2.xpose.msra.mxu0 0.0
  %589 = vmatprep.subr.mxu0 0.0
  %590 = vmatpush2.xpose.msra.mxu0 0.0
  %591 = vmatprep.subr.mxu0 0.0
  %592 = vmatpush2.xpose.msra.mxu0 0.0
  %593 = vmatprep.subr.mxu0 0.0
  %594 = vmatpush2.xpose.msra.mxu0 0.0
  %595 = vmatprep.subr.mxu0 0.0
  %596 = vmatpush2.xpose.msra.mxu0 0.0
  %597 = vmatprep.subr.mxu0 0.0
  %598 = vmatpush2.xpose.msra.mxu0 0.0
  %599 = vmatprep.mubr.f32.mxu0 0.0
  %600 = vmatmul.mubr.f32.gmra.mxu0 %v534
  %v601 = vpop.f32.mrf.mxu0
  %v602 = vadd.f32 0.0, %v601
  %v603 = vpop.f32.mrf.mxu0
  %604 = vdwg.mxu0
  %v605 = vpack.c.bf16 %v602, %v602
  %v606 = vld [vmem:[%s8] sm:$0xff]
  %v607 = vld [vmem:[%s8 + $0x8] sm:$0xff]
  %v608 = vld [vmem:[%s8 + $0x10] sm:$0xff]
  %v609 = vld [vmem:[%s8 + $0x18] sm:$0xff]
  %v610 = vld [vmem:[%s8 + $0x20] sm:$0xff]
  %v611 = vld [vmem:[%s8 + $0x28] sm:$0xff]
  %v612 = vld [vmem:[%s8 + $0x30] sm:$0xff]
  %v613 = vld [vmem:[%s8 + $0x38] sm:$0xff]
  %v614 = vld [vmem:[%s8 + $0x40] sm:$0xff]
  %v615 = vld [vmem:[%s8 + $0x48] sm:$0xff]
  %v616 = vld [vmem:[%s8 + $0x50] sm:$0xff]
  %v617 = vld [vmem:[%s8 + $0x58] sm:$0xff]
  %v618 = vld [vmem:[%s8 + $0x60] sm:$0xff]
  %v619 = vld [vmem:[%s8 + $0x68] sm:$0xff]
  %v620 = vld [vmem:[%s8 + $0x70] sm:$0xff]
  %v621 = vld [vmem:[%s8 + $0x78] sm:$0xff]
  %v622 = vld [vmem:[%s9] sm:$0xff]
  %v624 = vlaneseq
  %v625 = vshrl.u32 %v624, 7
  %v626 = vsub.s32 0, %v625
  %v627 = vrot.slane %v622, %v626
  %v628 = vlaneseq
  %v629 = vshrl.u32 %v628, 7
  %v630 = vsub.s32 1, %v629
  %v631 = vrot.slane %v622, %v630
  %v632 = vlaneseq
  %v633 = vshrl.u32 %v632, 7
  %v634 = vsub.s32 2, %v633
  %v635 = vrot.slane %v622, %v634
  %v636 = vlaneseq
  %v637 = vshrl.u32 %v636, 7
  %v638 = vsub.s32 3, %v637
  %v639 = vrot.slane %v622, %v638
  %v640 = vlaneseq
  %v641 = vshrl.u32 %v640, 7
  %v642 = vsub.s32 4, %v641
  %v643 = vrot.slane %v622, %v642
  %v644 = vlaneseq
  %v645 = vshrl.u32 %v644, 7
  %v646 = vsub.s32 5, %v645
  %v647 = vrot.slane %v622, %v646
  %v648 = vlaneseq
  %v649 = vshrl.u32 %v648, 7
  %v650 = vsub.s32 6, %v649
  %v651 = vrot.slane %v622, %v650
  %v652 = vlaneseq
  %v653 = vshrl.u32 %v652, 7
  %v654 = vsub.s32 7, %v653
  %v655 = vrot.slane %v622, %v654
  %v680 = vunpack.c.l.b16 %v606
  %v681 = vunpack.c.h.b16 %v606
  %v682 = vunpack.c.l.b16 %v607
  %v683 = vunpack.c.h.b16 %v607
  %v684 = vunpack.c.l.b16 %v608
  %v685 = vunpack.c.h.b16 %v608
  %v686 = vunpack.c.l.b16 %v609
  %v687 = vunpack.c.h.b16 %v609
  %v688 = vunpack.c.l.b16 %v610
  %v689 = vunpack.c.h.b16 %v610
  %v690 = vunpack.c.l.b16 %v611
  %v691 = vunpack.c.h.b16 %v611
  %v692 = vunpack.c.l.b16 %v612
  %v693 = vunpack.c.h.b16 %v612
  %v694 = vunpack.c.l.b16 %v613
  %v695 = vunpack.c.h.b16 %v613
  %v696 = vunpack.c.l.b16 %v614
  %v697 = vunpack.c.h.b16 %v614
  %v698 = vunpack.c.l.b16 %v615
  %v699 = vunpack.c.h.b16 %v615
  %v700 = vunpack.c.l.b16 %v616
  %v701 = vunpack.c.h.b16 %v616
  %v702 = vunpack.c.l.b16 %v617
  %v703 = vunpack.c.h.b16 %v617
  %v704 = vunpack.c.l.b16 %v618
  %v705 = vunpack.c.h.b16 %v618
  %v706 = vunpack.c.l.b16 %v619
  %v707 = vunpack.c.h.b16 %v619
  %v708 = vunpack.c.l.b16 %v620
  %v709 = vunpack.c.h.b16 %v620
  %v710 = vunpack.c.l.b16 %v621
  %v711 = vunpack.c.h.b16 %v621
  %v712 = vpack.c.b16 %v688, %v680
  %v713 = vpack.c.b16 %v689, %v681
  %v714 = vpack.c.b16 %v690, %v682
  %v715 = vpack.c.b16 %v691, %v683
  %v716 = vpack.c.b16 %v692, %v684
  %v717 = vpack.c.b16 %v693, %v685
  %v718 = vpack.c.b16 %v694, %v686
  %v719 = vpack.c.b16 %v695, %v687
  %v720 = vpack.c.b16 %v704, %v696
  %v721 = vpack.c.b16 %v705, %v697
  %v722 = vpack.c.b16 %v706, %v698
  %v723 = vpack.c.b16 %v707, %v699
  %v724 = vpack.c.b16 %v708, %v700
  %v725 = vpack.c.b16 %v709, %v701
  %v726 = vpack.c.b16 %v710, %v702
  %v727 = vpack.c.b16 %v711, %v703
  %vm744 = vcmask 261120
  %v746 = vsel %vm744, %v605, 0
  %748 = vmatprep.subr.bf16.mxu0 0
  %749 = vmatpush1.bf16.msra.mxu0 0
  %750 = vmatprep.subr.bf16.mxu0 0
  %751 = vmatpush1.bf16.msra.mxu0 0
  %752 = vmatprep.subr.bf16.mxu0 0
  %753 = vmatpush1.bf16.msra.mxu0 0
  %754 = vmatprep.subr.bf16.mxu0 0
  %755 = vmatpush1.bf16.msra.mxu0 0
  %756 = vmatprep.subr.bf16.mxu0 0
  %757 = vmatpush1.bf16.msra.mxu0 0
  %758 = vmatprep.subr.bf16.mxu0 0
  %759 = vmatpush1.bf16.msra.mxu0 0
  %760 = vmatprep.subr.bf16.mxu0 %v721
  %761 = vmatpush1.bf16.msra.mxu0 %v720
  %762 = vmatprep.subr.bf16.mxu0 %v713
  %763 = vmatpush1.bf16.msra.mxu0 %v712
  %764 = vmatprep.subr.bf16.mxu0 0
  %765 = vmatpush2.bf16.msra.mxu0 0
  %766 = vmatprep.subr.bf16.mxu0 0
  %767 = vmatpush2.bf16.msra.mxu0 0
  %768 = vmatprep.subr.bf16.mxu0 0
  %769 = vmatpush2.bf16.msra.mxu0 0
  %770 = vmatprep.subr.bf16.mxu0 0
  %771 = vmatpush2.bf16.msra.mxu0 0
  %772 = vmatprep.subr.bf16.mxu0 0
  %773 = vmatpush2.bf16.msra.mxu0 0
  %774 = vmatprep.subr.bf16.mxu0 0
  %775 = vmatpush2.bf16.msra.mxu0 0
  %776 = vmatprep.subr.bf16.mxu0 0
  %777 = vmatpush2.bf16.msra.mxu0 0
  %778 = vmatprep.subr.bf16.mxu0 0
  %779 = vmatpush2.bf16.msra.mxu0 0
  %780 = vmatprep.mubr.bf16.mxu0 0
  %781 = vmatmul.mubr.bf16.gmra.mxu0 %v746
  %v782 = vpop.f32.mrf.mxu0
  %v783 = vadd.f32 %v627, %v782
  %v784 = vpop.f32.mrf.mxu0
  %v785 = vadd.f32 %v631, %v784
  %v786 = vpop.f32.mrf.mxu0
  %v787 = vpop.f32.mrf.mxu0
  %788 = vdwg.mxu0
  %789 = vmatprep.subr.bf16.mxu0 0
  %790 = vmatpush1.bf16.msra.mxu0 0
  %791 = vmatprep.subr.bf16.mxu0 0
  %792 = vmatpush1.bf16.msra.mxu0 0
  %793 = vmatprep.subr.bf16.mxu0 0
  %794 = vmatpush1.bf16.msra.mxu0 0
  %795 = vmatprep.subr.bf16.mxu0 0
  %796 = vmatpush1.bf16.msra.mxu0 0
  %797 = vmatprep.subr.bf16.mxu0 0
  %798 = vmatpush1.bf16.msra.mxu0 0
  %799 = vmatprep.subr.bf16.mxu0 0
  %800 = vmatpush1.bf16.msra.mxu0 0
  %801 = vmatprep.subr.bf16.mxu0 %v723
  %802 = vmatpush1.bf16.msra.mxu0 %v722
  %803 = vmatprep.subr.bf16.mxu0 %v715
  %804 = vmatpush1.bf16.msra.mxu0 %v714
  %805 = vmatprep.subr.bf16.mxu0 0
  %806 = vmatpush2.bf16.msra.mxu0 0
  %807 = vmatprep.subr.bf16.mxu0 0
  %808 = vmatpush2.bf16.msra.mxu0 0
  %809 = vmatprep.subr.bf16.mxu0 0
  %810 = vmatpush2.bf16.msra.mxu0 0
  %811 = vmatprep.subr.bf16.mxu0 0
  %812 = vmatpush2.bf16.msra.mxu0 0
  %813 = vmatprep.subr.bf16.mxu0 0
  %814 = vmatpush2.bf16.msra.mxu0 0
  %815 = vmatprep.subr.bf16.mxu0 0
  %816 = vmatpush2.bf16.msra.mxu0 0
  %817 = vmatprep.subr.bf16.mxu0 0
  %818 = vmatpush2.bf16.msra.mxu0 0
  %819 = vmatprep.subr.bf16.mxu0 0
  %820 = vmatpush2.bf16.msra.mxu0 0
  %821 = vmatprep.mubr.bf16.mxu0 0
  %822 = vmatmul.mubr.bf16.gmra.mxu0 %v746
  %v823 = vpop.f32.mrf.mxu0
  %v824 = vadd.f32 %v635, %v823
  %v825 = vpop.f32.mrf.mxu0
  %v826 = vadd.f32 %v639, %v825
  %v827 = vpop.f32.mrf.mxu0
  %v828 = vpop.f32.mrf.mxu0
  %829 = vdwg.mxu0
  %830 = vmatprep.subr.bf16.mxu0 0
  %831 = vmatpush1.bf16.msra.mxu0 0
  %832 = vmatprep.subr.bf16.mxu0 0
  %833 = vmatpush1.bf16.msra.mxu0 0
  %834 = vmatprep.subr.bf16.mxu0 0
  %835 = vmatpush1.bf16.msra.mxu0 0
  %836 = vmatprep.subr.bf16.mxu0 0
  %837 = vmatpush1.bf16.msra.mxu0 0
  %838 = vmatprep.subr.bf16.mxu0 0
  %839 = vmatpush1.bf16.msra.mxu0 0
  %840 = vmatprep.subr.bf16.mxu0 0
  %841 = vmatpush1.bf16.msra.mxu0 0
  %842 = vmatprep.subr.bf16.mxu0 %v725
  %843 = vmatpush1.bf16.msra.mxu0 %v724
  %844 = vmatprep.subr.bf16.mxu0 %v717
  %845 = vmatpush1.bf16.msra.mxu0 %v716
  %846 = vmatprep.subr.bf16.mxu0 0
  %847 = vmatpush2.bf16.msra.mxu0 0
  %848 = vmatprep.subr.bf16.mxu0 0
  %849 = vmatpush2.bf16.msra.mxu0 0
  %850 = vmatprep.subr.bf16.mxu0 0
  %851 = vmatpush2.bf16.msra.mxu0 0
  %852 = vmatprep.subr.bf16.mxu0 0
  %853 = vmatpush2.bf16.msra.mxu0 0
  %854 = vmatprep.subr.bf16.mxu0 0
  %855 = vmatpush2.bf16.msra.mxu0 0
  %856 = vmatprep.subr.bf16.mxu0 0
  %857 = vmatpush2.bf16.msra.mxu0 0
  %858 = vmatprep.subr.bf16.mxu0 0
  %859 = vmatpush2.bf16.msra.mxu0 0
  %860 = vmatprep.subr.bf16.mxu0 0
  %861 = vmatpush2.bf16.msra.mxu0 0
  %862 = vmatprep.mubr.bf16.mxu0 0
  %863 = vmatmul.mubr.bf16.gmra.mxu0 %v746
  %v864 = vpop.f32.mrf.mxu0
  %v865 = vadd.f32 %v643, %v864
  %v866 = vpop.f32.mrf.mxu0
  %v867 = vadd.f32 %v647, %v866
  %v868 = vpop.f32.mrf.mxu0
  %v869 = vpop.f32.mrf.mxu0
  %870 = vdwg.mxu0
  %871 = vmatprep.subr.bf16.mxu0 0
  %872 = vmatpush1.bf16.msra.mxu0 0
  %873 = vmatprep.subr.bf16.mxu0 0
  %874 = vmatpush1.bf16.msra.mxu0 0
  %875 = vmatprep.subr.bf16.mxu0 0
  %876 = vmatpush1.bf16.msra.mxu0 0
  %877 = vmatprep.subr.bf16.mxu0 0
  %878 = vmatpush1.bf16.msra.mxu0 0
  %879 = vmatprep.subr.bf16.mxu0 0
  %880 = vmatpush1.bf16.msra.mxu0 0
  %881 = vmatprep.subr.bf16.mxu0 0
  %882 = vmatpush1.bf16.msra.mxu0 0
  %883 = vmatprep.subr.bf16.mxu0 %v727
  %884 = vmatpush1.bf16.msra.mxu0 %v726
  %885 = vmatprep.subr.bf16.mxu0 %v719
  %886 = vmatpush1.bf16.msra.mxu0 %v718
  %887 = vmatprep.subr.bf16.mxu0 0
  %888 = vmatpush2.bf16.msra.mxu0 0
  %889 = vmatprep.subr.bf16.mxu0 0
  %890 = vmatpush2.bf16.msra.mxu0 0
  %891 = vmatprep.subr.bf16.mxu0 0
  %892 = vmatpush2.bf16.msra.mxu0 0
  %893 = vmatprep.subr.bf16.mxu0 0
  %894 = vmatpush2.bf16.msra.mxu0 0
  %895 = vmatprep.subr.bf16.mxu0 0
  %896 = vmatpush2.bf16.msra.mxu0 0
  %897 = vmatprep.subr.bf16.mxu0 0
  %898 = vmatpush2.bf16.msra.mxu0 0
  %899 = vmatprep.subr.bf16.mxu0 0
  %900 = vmatpush2.bf16.msra.mxu0 0
  %901 = vmatprep.subr.bf16.mxu0 0
  %902 = vmatpush2.bf16.msra.mxu0 0
  %903 = vmatprep.mubr.bf16.mxu0 0
  %904 = vmatmul.mubr.bf16.gmra.mxu0 %v746
  %v905 = vpop.f32.mrf.mxu0
  %v906 = vadd.f32 %v651, %v905
  %v907 = vpop.f32.mrf.mxu0
  %v908 = vadd.f32 %v655, %v907
  %v909 = vpop.f32.mrf.mxu0
  %v910 = vpop.f32.mrf.mxu0
  %911 = vdwg.mxu0
  %vm912 = vcmp.gt.f32.partialorder %v783, 0.0
  %vm913 = vcmp.gt.f32.partialorder %v785, 0.0
  %vm914 = vcmp.gt.f32.partialorder %v824, 0.0
  %vm915 = vcmp.gt.f32.partialorder %v826, 0.0
  %vm916 = vcmp.gt.f32.partialorder %v865, 0.0
  %vm917 = vcmp.gt.f32.partialorder %v867, 0.0
  %vm918 = vcmp.gt.f32.partialorder %v906, 0.0
  %vm919 = vcmp.gt.f32.partialorder %v908, 0.0
  %v920 = vmul.f32 %v783, 0.2
  %v921 = vmul.f32 %v785, 0.2
  %v922 = vmul.f32 %v824, 0.2
  %v923 = vmul.f32 %v826, 0.2
  %v924 = vmul.f32 %v865, 0.2
  %v925 = vmul.f32 %v867, 0.2
  %v926 = vmul.f32 %v906, 0.2
  %v927 = vmul.f32 %v908, 0.2
  %v928 = vsel %vm912, %v783, %v920
  %v929 = vsel %vm913, %v785, %v921
  %v930 = vsel %vm914, %v824, %v922
  %v931 = vsel %vm915, %v826, %v923
  %v932 = vsel %vm916, %v865, %v924
  %v933 = vsel %vm917, %v867, %v925
  %v934 = vsel %vm918, %v906, %v926
  %v935 = vsel %vm919, %v908, %v927
  %s936 = smul.u32 4, 128
  %s937 = smul.u32 %s936, 2
  %s938 = sshll.u32 %s937, 4
  %939 = dma.done [#allocation3], %s938
  %v940 = vpack.c.bf16 %v928, %v928
  %v941 = vpack.c.bf16 %v929, %v929
  %v942 = vpack.c.bf16 %v930, %v930
  %v943 = vpack.c.bf16 %v931, %v931
  %v944 = vpack.c.bf16 %v932, %v932
  %v945 = vpack.c.bf16 %v933, %v933
  %v946 = vpack.c.bf16 %v934, %v934
  %v947 = vpack.c.bf16 %v935, %v935
  %v948 = vld [vmem:[#allocation2] sm:$0xff]
  %v949 = vld [vmem:[#allocation2 + $0x8] sm:$0xff]
  %v950 = vld [vmem:[#allocation2 + $0x10] sm:$0xff]
  %v951 = vld [vmem:[#allocation2 + $0x18] sm:$0xff]
  %v952 = vld [vmem:[#allocation2 + $0x20] sm:$0xff]
  %v953 = vld [vmem:[#allocation2 + $0x28] sm:$0xff]
  %v954 = vld [vmem:[#allocation2 + $0x30] sm:$0xff]
  %v955 = vld [vmem:[#allocation2 + $0x38] sm:$0xff]
  %v956 = vld [vmem:[#allocation2 + $0x40] sm:$0xff]
  %v957 = vld [vmem:[#allocation2 + $0x48] sm:$0xff]
  %v958 = vld [vmem:[#allocation2 + $0x50] sm:$0xff]
  %v959 = vld [vmem:[#allocation2 + $0x58] sm:$0xff]
  %v960 = vld [vmem:[#allocation2 + $0x60] sm:$0xff]
  %v961 = vld [vmem:[#allocation2 + $0x68] sm:$0xff]
  %v962 = vld [vmem:[#allocation2 + $0x70] sm:$0xff]
  %v963 = vld [vmem:[#allocation2 + $0x78] sm:$0xff]
  %v964 = vld [vmem:[#allocation2 + $0x80] sm:$0xff]
  %v965 = vld [vmem:[#allocation2 + $0x88] sm:$0xff]
  %v966 = vld [vmem:[#allocation2 + $0x90] sm:$0xff]
  %v967 = vld [vmem:[#allocation2 + $0x98] sm:$0xff]
  %v968 = vld [vmem:[#allocation2 + $0xa0] sm:$0xff]
  %v969 = vld [vmem:[#allocation2 + $0xa8] sm:$0xff]
  %v970 = vld [vmem:[#allocation2 + $0xb0] sm:$0xff]
  %v971 = vld [vmem:[#allocation2 + $0xb8] sm:$0xff]
  %v972 = vld [vmem:[#allocation2 + $0xc0] sm:$0xff]
  %v973 = vld [vmem:[#allocation2 + $0xc8] sm:$0xff]
  %v974 = vld [vmem:[#allocation2 + $0xd0] sm:$0xff]
  %v975 = vld [vmem:[#allocation2 + $0xd8] sm:$0xff]
  %v976 = vld [vmem:[#allocation2 + $0xe0] sm:$0xff]
  %v977 = vld [vmem:[#allocation2 + $0xe8] sm:$0xff]
  %v978 = vld [vmem:[#allocation2 + $0xf0] sm:$0xff]
  %v979 = vld [vmem:[#allocation2 + $0xf8] sm:$0xff]
  %v980 = vld [vmem:[#allocation2 + $0x100] sm:$0xff]
  %v981 = vld [vmem:[#allocation2 + $0x108] sm:$0xff]
  %v982 = vld [vmem:[#allocation2 + $0x110] sm:$0xff]
  %v983 = vld [vmem:[#allocation2 + $0x118] sm:$0xff]
  %v984 = vld [vmem:[#allocation2 + $0x120] sm:$0xff]
  %v985 = vld [vmem:[#allocation2 + $0x128] sm:$0xff]
  %v986 = vld [vmem:[#allocation2 + $0x130] sm:$0xff]
  %v987 = vld [vmem:[#allocation2 + $0x138] sm:$0xff]
  %v988 = vld [vmem:[#allocation2 + $0x140] sm:$0xff]
  %v989 = vld [vmem:[#allocation2 + $0x148] sm:$0xff]
  %v990 = vld [vmem:[#allocation2 + $0x150] sm:$0xff]
  %v991 = vld [vmem:[#allocation2 + $0x158] sm:$0xff]
  %v992 = vld [vmem:[#allocation2 + $0x160] sm:$0xff]
  %v993 = vld [vmem:[#allocation2 + $0x168] sm:$0xff]
  %v994 = vld [vmem:[#allocation2 + $0x170] sm:$0xff]
  %v995 = vld [vmem:[#allocation2 + $0x178] sm:$0xff]
  %v996 = vld [vmem:[#allocation2 + $0x180] sm:$0xff]
  %v997 = vld [vmem:[#allocation2 + $0x188] sm:$0xff]
  %v998 = vld [vmem:[#allocation2 + $0x190] sm:$0xff]
  %v999 = vld [vmem:[#allocation2 + $0x198] sm:$0xff]
  %v1000 = vld [vmem:[#allocation2 + $0x1a0] sm:$0xff]
  %v1001 = vld [vmem:[#allocation2 + $0x1a8] sm:$0xff]
  %v1002 = vld [vmem:[#allocation2 + $0x1b0] sm:$0xff]
  %v1003 = vld [vmem:[#allocation2 + $0x1b8] sm:$0xff]
  %v1004 = vld [vmem:[#allocation2 + $0x1c0] sm:$0xff]
  %v1005 = vld [vmem:[#allocation2 + $0x1c8] sm:$0xff]
  %v1006 = vld [vmem:[#allocation2 + $0x1d0] sm:$0xff]
  %v1007 = vld [vmem:[#allocation2 + $0x1d8] sm:$0xff]
  %v1008 = vld [vmem:[#allocation2 + $0x1e0] sm:$0xff]
  %v1009 = vld [vmem:[#allocation2 + $0x1e8] sm:$0xff]
  %v1010 = vld [vmem:[#allocation2 + $0x1f0] sm:$0xff]
  %v1011 = vld [vmem:[#allocation2 + $0x1f8] sm:$0xff]
  %v1012 = vld [vmem:[#allocation2 + $0x200] sm:$0xff]
  %v1013 = vld [vmem:[#allocation2 + $0x208] sm:$0xff]
  %v1014 = vld [vmem:[#allocation2 + $0x210] sm:$0xff]
  %v1015 = vld [vmem:[#allocation2 + $0x218] sm:$0xff]
  %v1016 = vld [vmem:[#allocation2 + $0x220] sm:$0xff]
  %v1017 = vld [vmem:[#allocation2 + $0x228] sm:$0xff]
  %v1018 = vld [vmem:[#allocation2 + $0x230] sm:$0xff]
  %v1019 = vld [vmem:[#allocation2 + $0x238] sm:$0xff]
  %v1020 = vld [vmem:[#allocation2 + $0x240] sm:$0xff]
  %v1021 = vld [vmem:[#allocation2 + $0x248] sm:$0xff]
  %v1022 = vld [vmem:[#allocation2 + $0x250] sm:$0xff]
  %v1023 = vld [vmem:[#allocation2 + $0x258] sm:$0xff]
  %v1024 = vld [vmem:[#allocation2 + $0x260] sm:$0xff]
  %v1025 = vld [vmem:[#allocation2 + $0x268] sm:$0xff]
  %v1026 = vld [vmem:[#allocation2 + $0x270] sm:$0xff]
  %v1027 = vld [vmem:[#allocation2 + $0x278] sm:$0xff]
  %v1028 = vld [vmem:[#allocation2 + $0x280] sm:$0xff]
  %v1029 = vld [vmem:[#allocation2 + $0x288] sm:$0xff]
  %v1030 = vld [vmem:[#allocation2 + $0x290] sm:$0xff]
  %v1031 = vld [vmem:[#allocation2 + $0x298] sm:$0xff]
  %v1032 = vld [vmem:[#allocation2 + $0x2a0] sm:$0xff]
  %v1033 = vld [vmem:[#allocation2 + $0x2a8] sm:$0xff]
  %v1034 = vld [vmem:[#allocation2 + $0x2b0] sm:$0xff]
  %v1035 = vld [vmem:[#allocation2 + $0x2b8] sm:$0xff]
  %v1036 = vld [vmem:[#allocation2 + $0x2c0] sm:$0xff]
  %v1037 = vld [vmem:[#allocation2 + $0x2c8] sm:$0xff]
  %v1038 = vld [vmem:[#allocation2 + $0x2d0] sm:$0xff]
  %v1039 = vld [vmem:[#allocation2 + $0x2d8] sm:$0xff]
  %v1040 = vld [vmem:[#allocation2 + $0x2e0] sm:$0xff]
  %v1041 = vld [vmem:[#allocation2 + $0x2e8] sm:$0xff]
  %v1042 = vld [vmem:[#allocation2 + $0x2f0] sm:$0xff]
  %v1043 = vld [vmem:[#allocation2 + $0x2f8] sm:$0xff]
  %v1044 = vld [vmem:[#allocation2 + $0x300] sm:$0xff]
  %v1045 = vld [vmem:[#allocation2 + $0x308] sm:$0xff]
  %v1046 = vld [vmem:[#allocation2 + $0x310] sm:$0xff]
  %v1047 = vld [vmem:[#allocation2 + $0x318] sm:$0xff]
  %v1048 = vld [vmem:[#allocation2 + $0x320] sm:$0xff]
  %v1049 = vld [vmem:[#allocation2 + $0x328] sm:$0xff]
  %v1050 = vld [vmem:[#allocation2 + $0x330] sm:$0xff]
  %v1051 = vld [vmem:[#allocation2 + $0x338] sm:$0xff]
  %v1052 = vld [vmem:[#allocation2 + $0x340] sm:$0xff]
  %v1053 = vld [vmem:[#allocation2 + $0x348] sm:$0xff]
  %v1054 = vld [vmem:[#allocation2 + $0x350] sm:$0xff]
  %v1055 = vld [vmem:[#allocation2 + $0x358] sm:$0xff]
  %v1056 = vld [vmem:[#allocation2 + $0x360] sm:$0xff]
  %v1057 = vld [vmem:[#allocation2 + $0x368] sm:$0xff]
  %v1058 = vld [vmem:[#allocation2 + $0x370] sm:$0xff]
  %v1059 = vld [vmem:[#allocation2 + $0x378] sm:$0xff]
  %v1060 = vld [vmem:[#allocation2 + $0x380] sm:$0xff]
  %v1061 = vld [vmem:[#allocation2 + $0x388] sm:$0xff]
  %v1062 = vld [vmem:[#allocation2 + $0x390] sm:$0xff]
  %v1063 = vld [vmem:[#allocation2 + $0x398] sm:$0xff]
  %v1064 = vld [vmem:[#allocation2 + $0x3a0] sm:$0xff]
  %v1065 = vld [vmem:[#allocation2 + $0x3a8] sm:$0xff]
  %v1066 = vld [vmem:[#allocation2 + $0x3b0] sm:$0xff]
  %v1067 = vld [vmem:[#allocation2 + $0x3b8] sm:$0xff]
  %v1068 = vld [vmem:[#allocation2 + $0x3c0] sm:$0xff]
  %v1069 = vld [vmem:[#allocation2 + $0x3c8] sm:$0xff]
  %v1070 = vld [vmem:[#allocation2 + $0x3d0] sm:$0xff]
  %v1071 = vld [vmem:[#allocation2 + $0x3d8] sm:$0xff]
  %v1072 = vld [vmem:[#allocation2 + $0x3e0] sm:$0xff]
  %v1073 = vld [vmem:[#allocation2 + $0x3e8] sm:$0xff]
  %v1074 = vld [vmem:[#allocation2 + $0x3f0] sm:$0xff]
  %v1075 = vld [vmem:[#allocation2 + $0x3f8] sm:$0xff]
  %v1076 = vld [vmem:[%s11] sm:$0x3]
  %v1078 = vlaneseq
  %v1079 = vshrl.u32 %v1078, 7
  %v1080 = vsub.s32 0, %v1079
  %v1081 = vrot.slane %v1076, %v1080
  %v1082 = vlaneseq
  %v1083 = vshrl.u32 %v1082, 7
  %v1084 = vsub.s32 1, %v1083
  %v1085 = vrot.slane %v1076, %v1084
  %v1216 = vunpack.c.l.b16 %v948
  %v1217 = vunpack.c.h.b16 %v948
  %v1218 = vunpack.c.l.b16 %v949
  %v1219 = vunpack.c.h.b16 %v949
  %v1220 = vunpack.c.l.b16 %v950
  %v1221 = vunpack.c.h.b16 %v950
  %v1222 = vunpack.c.l.b16 %v951
  %v1223 = vunpack.c.h.b16 %v951
  %v1224 = vunpack.c.l.b16 %v952
  %v1225 = vunpack.c.h.b16 %v952
  %v1226 = vunpack.c.l.b16 %v953
  %v1227 = vunpack.c.h.b16 %v953
  %v1228 = vunpack.c.l.b16 %v954
  %v1229 = vunpack.c.h.b16 %v954
  %v1230 = vunpack.c.l.b16 %v955
  %v1231 = vunpack.c.h.b16 %v955
  %v1232 = vunpack.c.l.b16 %v956
  %v1233 = vunpack.c.h.b16 %v956
  %v1234 = vunpack.c.l.b16 %v957
  %v1235 = vunpack.c.h.b16 %v957
  %v1236 = vunpack.c.l.b16 %v958
  %v1237 = vunpack.c.h.b16 %v958
  %v1238 = vunpack.c.l.b16 %v959
  %v1239 = vunpack.c.h.b16 %v959
  %v1240 = vunpack.c.l.b16 %v960
  %v1241 = vunpack.c.h.b16 %v960
  %v1242 = vunpack.c.l.b16 %v961
  %v1243 = vunpack.c.h.b16 %v961
  %v1244 = vunpack.c.l.b16 %v962
  %v1245 = vunpack.c.h.b16 %v962
  %v1246 = vunpack.c.l.b16 %v963
  %v1247 = vunpack.c.h.b16 %v963
  %v1248 = vunpack.c.l.b16 %v964
  %v1249 = vunpack.c.h.b16 %v964
  %v1250 = vunpack.c.l.b16 %v965
  %v1251 = vunpack.c.h.b16 %v965
  %v1252 = vunpack.c.l.b16 %v966
  %v1253 = vunpack.c.h.b16 %v966
  %v1254 = vunpack.c.l.b16 %v967
  %v1255 = vunpack.c.h.b16 %v967
  %v1256 = vunpack.c.l.b16 %v968
  %v1257 = vunpack.c.h.b16 %v968
  %v1258 = vunpack.c.l.b16 %v969
  %v1259 = vunpack.c.h.b16 %v969
  %v1260 = vunpack.c.l.b16 %v970
  %v1261 = vunpack.c.h.b16 %v970
  %v1262 = vunpack.c.l.b16 %v971
  %v1263 = vunpack.c.h.b16 %v971
  %v1264 = vunpack.c.l.b16 %v972
  %v1265 = vunpack.c.h.b16 %v972
  %v1266 = vunpack.c.l.b16 %v973
  %v1267 = vunpack.c.h.b16 %v973
  %v1268 = vunpack.c.l.b16 %v974
  %v1269 = vunpack.c.h.b16 %v974
  %v1270 = vunpack.c.l.b16 %v975
  %v1271 = vunpack.c.h.b16 %v975
  %v1272 = vunpack.c.l.b16 %v976
  %v1273 = vunpack.c.h.b16 %v976
  %v1274 = vunpack.c.l.b16 %v977
  %v1275 = vunpack.c.h.b16 %v977
  %v1276 = vunpack.c.l.b16 %v978
  %v1277 = vunpack.c.h.b16 %v978
  %v1278 = vunpack.c.l.b16 %v979
  %v1279 = vunpack.c.h.b16 %v979
  %v1280 = vunpack.c.l.b16 %v980
  %v1281 = vunpack.c.h.b16 %v980
  %v1282 = vunpack.c.l.b16 %v981
  %v1283 = vunpack.c.h.b16 %v981
  %v1284 = vunpack.c.l.b16 %v982
  %v1285 = vunpack.c.h.b16 %v982
  %v1286 = vunpack.c.l.b16 %v983
  %v1287 = vunpack.c.h.b16 %v983
  %v1288 = vunpack.c.l.b16 %v984
  %v1289 = vunpack.c.h.b16 %v984
  %v1290 = vunpack.c.l.b16 %v985
  %v1291 = vunpack.c.h.b16 %v985
  %v1292 = vunpack.c.l.b16 %v986
  %v1293 = vunpack.c.h.b16 %v986
  %v1294 = vunpack.c.l.b16 %v987
  %v1295 = vunpack.c.h.b16 %v987
  %v1296 = vunpack.c.l.b16 %v988
  %v1297 = vunpack.c.h.b16 %v988
  %v1298 = vunpack.c.l.b16 %v989
  %v1299 = vunpack.c.h.b16 %v989
  %v1300 = vunpack.c.l.b16 %v990
  %v1301 = vunpack.c.h.b16 %v990
  %v1302 = vunpack.c.l.b16 %v991
  %v1303 = vunpack.c.h.b16 %v991
  %v1304 = vunpack.c.l.b16 %v992
  %v1305 = vunpack.c.h.b16 %v992
  %v1306 = vunpack.c.l.b16 %v993
  %v1307 = vunpack.c.h.b16 %v993
  %v1308 = vunpack.c.l.b16 %v994
  %v1309 = vunpack.c.h.b16 %v994
  %v1310 = vunpack.c.l.b16 %v995
  %v1311 = vunpack.c.h.b16 %v995
  %v1312 = vunpack.c.l.b16 %v996
  %v1313 = vunpack.c.h.b16 %v996
  %v1314 = vunpack.c.l.b16 %v997
  %v1315 = vunpack.c.h.b16 %v997
  %v1316 = vunpack.c.l.b16 %v998
  %v1317 = vunpack.c.h.b16 %v998
  %v1318 = vunpack.c.l.b16 %v999
  %v1319 = vunpack.c.h.b16 %v999
  %v1320 = vunpack.c.l.b16 %v1000
  %v1321 = vunpack.c.h.b16 %v1000
  %v1322 = vunpack.c.l.b16 %v1001
  %v1323 = vunpack.c.h.b16 %v1001
  %v1324 = vunpack.c.l.b16 %v1002
  %v1325 = vunpack.c.h.b16 %v1002
  %v1326 = vunpack.c.l.b16 %v1003
  %v1327 = vunpack.c.h.b16 %v1003
  %v1328 = vunpack.c.l.b16 %v1004
  %v1329 = vunpack.c.h.b16 %v1004
  %v1330 = vunpack.c.l.b16 %v1005
  %v1331 = vunpack.c.h.b16 %v1005
  %v1332 = vunpack.c.l.b16 %v1006
  %v1333 = vunpack.c.h.b16 %v1006
  %v1334 = vunpack.c.l.b16 %v1007
  %v1335 = vunpack.c.h.b16 %v1007
  %v1336 = vunpack.c.l.b16 %v1008
  %v1337 = vunpack.c.h.b16 %v1008
  %v1338 = vunpack.c.l.b16 %v1009
  %v1339 = vunpack.c.h.b16 %v1009
  %v1340 = vunpack.c.l.b16 %v1010
  %v1341 = vunpack.c.h.b16 %v1010
  %v1342 = vunpack.c.l.b16 %v1011
  %v1343 = vunpack.c.h.b16 %v1011
  %v1344 = vunpack.c.l.b16 %v1012
  %v1345 = vunpack.c.h.b16 %v1012
  %v1346 = vunpack.c.l.b16 %v1013
  %v1347 = vunpack.c.h.b16 %v1013
  %v1348 = vunpack.c.l.b16 %v1014
  %v1349 = vunpack.c.h.b16 %v1014
  %v1350 = vunpack.c.l.b16 %v1015
  %v1351 = vunpack.c.h.b16 %v1015
  %v1352 = vunpack.c.l.b16 %v1016
  %v1353 = vunpack.c.h.b16 %v1016
  %v1354 = vunpack.c.l.b16 %v1017
  %v1355 = vunpack.c.h.b16 %v1017
  %v1356 = vunpack.c.l.b16 %v1018
  %v1357 = vunpack.c.h.b16 %v1018
  %v1358 = vunpack.c.l.b16 %v1019
  %v1359 = vunpack.c.h.b16 %v1019
  %v1360 = vunpack.c.l.b16 %v1020
  %v1361 = vunpack.c.h.b16 %v1020
  %v1362 = vunpack.c.l.b16 %v1021
  %v1363 = vunpack.c.h.b16 %v1021
  %v1364 = vunpack.c.l.b16 %v1022
  %v1365 = vunpack.c.h.b16 %v1022
  %v1366 = vunpack.c.l.b16 %v1023
  %v1367 = vunpack.c.h.b16 %v1023
  %v1368 = vunpack.c.l.b16 %v1024
  %v1369 = vunpack.c.h.b16 %v1024
  %v1370 = vunpack.c.l.b16 %v1025
  %v1371 = vunpack.c.h.b16 %v1025
  %v1372 = vunpack.c.l.b16 %v1026
  %v1373 = vunpack.c.h.b16 %v1026
  %v1374 = vunpack.c.l.b16 %v1027
  %v1375 = vunpack.c.h.b16 %v1027
  %v1376 = vunpack.c.l.b16 %v1028
  %v1377 = vunpack.c.h.b16 %v1028
  %v1378 = vunpack.c.l.b16 %v1029
  %v1379 = vunpack.c.h.b16 %v1029
  %v1380 = vunpack.c.l.b16 %v1030
  %v1381 = vunpack.c.h.b16 %v1030
  %v1382 = vunpack.c.l.b16 %v1031
  %v1383 = vunpack.c.h.b16 %v1031
  %v1384 = vunpack.c.l.b16 %v1032
  %v1385 = vunpack.c.h.b16 %v1032
  %v1386 = vunpack.c.l.b16 %v1033
  %v1387 = vunpack.c.h.b16 %v1033
  %v1388 = vunpack.c.l.b16 %v1034
  %v1389 = vunpack.c.h.b16 %v1034
  %v1390 = vunpack.c.l.b16 %v1035
  %v1391 = vunpack.c.h.b16 %v1035
  %v1392 = vunpack.c.l.b16 %v1036
  %v1393 = vunpack.c.h.b16 %v1036
  %v1394 = vunpack.c.l.b16 %v1037
  %v1395 = vunpack.c.h.b16 %v1037
  %v1396 = vunpack.c.l.b16 %v1038
  %v1397 = vunpack.c.h.b16 %v1038
  %v1398 = vunpack.c.l.b16 %v1039
  %v1399 = vunpack.c.h.b16 %v1039
  %v1400 = vunpack.c.l.b16 %v1040
  %v1401 = vunpack.c.h.b16 %v1040
  %v1402 = vunpack.c.l.b16 %v1041
  %v1403 = vunpack.c.h.b16 %v1041
  %v1404 = vunpack.c.l.b16 %v1042
  %v1405 = vunpack.c.h.b16 %v1042
  %v1406 = vunpack.c.l.b16 %v1043
  %v1407 = vunpack.c.h.b16 %v1043
  %v1408 = vunpack.c.l.b16 %v1044
  %v1409 = vunpack.c.h.b16 %v1044
  %v1410 = vunpack.c.l.b16 %v1045
  %v1411 = vunpack.c.h.b16 %v1045
  %v1412 = vunpack.c.l.b16 %v1046
  %v1413 = vunpack.c.h.b16 %v1046
  %v1414 = vunpack.c.l.b16 %v1047
  %v1415 = vunpack.c.h.b16 %v1047
  %v1416 = vunpack.c.l.b16 %v1048
  %v1417 = vunpack.c.h.b16 %v1048
  %v1418 = vunpack.c.l.b16 %v1049
  %v1419 = vunpack.c.h.b16 %v1049
  %v1420 = vunpack.c.l.b16 %v1050
  %v1421 = vunpack.c.h.b16 %v1050
  %v1422 = vunpack.c.l.b16 %v1051
  %v1423 = vunpack.c.h.b16 %v1051
  %v1424 = vunpack.c.l.b16 %v1052
  %v1425 = vunpack.c.h.b16 %v1052
  %v1426 = vunpack.c.l.b16 %v1053
  %v1427 = vunpack.c.h.b16 %v1053
  %v1428 = vunpack.c.l.b16 %v1054
  %v1429 = vunpack.c.h.b16 %v1054
  %v1430 = vunpack.c.l.b16 %v1055
  %v1431 = vunpack.c.h.b16 %v1055
  %v1432 = vunpack.c.l.b16 %v1056
  %v1433 = vunpack.c.h.b16 %v1056
  %v1434 = vunpack.c.l.b16 %v1057
  %v1435 = vunpack.c.h.b16 %v1057
  %v1436 = vunpack.c.l.b16 %v1058
  %v1437 = vunpack.c.h.b16 %v1058
  %v1438 = vunpack.c.l.b16 %v1059
  %v1439 = vunpack.c.h.b16 %v1059
  %v1440 = vunpack.c.l.b16 %v1060
  %v1441 = vunpack.c.h.b16 %v1060
  %v1442 = vunpack.c.l.b16 %v1061
  %v1443 = vunpack.c.h.b16 %v1061
  %v1444 = vunpack.c.l.b16 %v1062
  %v1445 = vunpack.c.h.b16 %v1062
  %v1446 = vunpack.c.l.b16 %v1063
  %v1447 = vunpack.c.h.b16 %v1063
  %v1448 = vunpack.c.l.b16 %v1064
  %v1449 = vunpack.c.h.b16 %v1064
  %v1450 = vunpack.c.l.b16 %v1065
  %v1451 = vunpack.c.h.b16 %v1065
  %v1452 = vunpack.c.l.b16 %v1066
  %v1453 = vunpack.c.h.b16 %v1066
  %v1454 = vunpack.c.l.b16 %v1067
  %v1455 = vunpack.c.h.b16 %v1067
  %v1456 = vunpack.c.l.b16 %v1068
  %v1457 = vunpack.c.h.b16 %v1068
  %v1458 = vunpack.c.l.b16 %v1069
  %v1459 = vunpack.c.h.b16 %v1069
  %v1460 = vunpack.c.l.b16 %v1070
  %v1461 = vunpack.c.h.b16 %v1070
  %v1462 = vunpack.c.l.b16 %v1071
  %v1463 = vunpack.c.h.b16 %v1071
  %v1464 = vunpack.c.l.b16 %v1072
  %v1465 = vunpack.c.h.b16 %v1072
  %v1466 = vunpack.c.l.b16 %v1073
  %v1467 = vunpack.c.h.b16 %v1073
  %v1468 = vunpack.c.l.b16 %v1074
  %v1469 = vunpack.c.h.b16 %v1074
  %v1470 = vunpack.c.l.b16 %v1075
  %v1471 = vunpack.c.h.b16 %v1075
  %v1472 = vpack.c.b16 %v1218, %v1216
  %v1473 = vpack.c.b16 %v1219, %v1217
  %v1474 = vpack.c.b16 %v1222, %v1220
  %v1475 = vpack.c.b16 %v1223, %v1221
  %v1476 = vpack.c.b16 %v1226, %v1224
  %v1477 = vpack.c.b16 %v1227, %v1225
  %v1478 = vpack.c.b16 %v1230, %v1228
  %v1479 = vpack.c.b16 %v1231, %v1229
  %v1480 = vpack.c.b16 %v1234, %v1232
  %v1481 = vpack.c.b16 %v1235, %v1233
  %v1482 = vpack.c.b16 %v1238, %v1236
  %v1483 = vpack.c.b16 %v1239, %v1237
  %v1484 = vpack.c.b16 %v1242, %v1240
  %v1485 = vpack.c.b16 %v1243, %v1241
  %v1486 = vpack.c.b16 %v1246, %v1244
  %v1487 = vpack.c.b16 %v1247, %v1245
  %v1488 = vpack.c.b16 %v1250, %v1248
  %v1489 = vpack.c.b16 %v1251, %v1249
  %v1490 = vpack.c.b16 %v1254, %v1252
  %v1491 = vpack.c.b16 %v1255, %v1253
  %v1492 = vpack.c.b16 %v1258, %v1256
  %v1493 = vpack.c.b16 %v1259, %v1257
  %v1494 = vpack.c.b16 %v1262, %v1260
  %v1495 = vpack.c.b16 %v1263, %v1261
  %v1496 = vpack.c.b16 %v1266, %v1264
  %v1497 = vpack.c.b16 %v1267, %v1265
  %v1498 = vpack.c.b16 %v1270, %v1268
  %v1499 = vpack.c.b16 %v1271, %v1269
  %v1500 = vpack.c.b16 %v1274, %v1272
  %v1501 = vpack.c.b16 %v1275, %v1273
  %v1502 = vpack.c.b16 %v1278, %v1276
  %v1503 = vpack.c.b16 %v1279, %v1277
  %v1504 = vpack.c.b16 %v1282, %v1280
  %v1505 = vpack.c.b16 %v1283, %v1281
  %v1506 = vpack.c.b16 %v1286, %v1284
  %v1507 = vpack.c.b16 %v1287, %v1285
  %v1508 = vpack.c.b16 %v1290, %v1288
  %v1509 = vpack.c.b16 %v1291, %v1289
  %v1510 = vpack.c.b16 %v1294, %v1292
  %v1511 = vpack.c.b16 %v1295, %v1293
  %v1512 = vpack.c.b16 %v1298, %v1296
  %v1513 = vpack.c.b16 %v1299, %v1297
  %v1514 = vpack.c.b16 %v1302, %v1300
  %v1515 = vpack.c.b16 %v1303, %v1301
  %v1516 = vpack.c.b16 %v1306, %v1304
  %v1517 = vpack.c.b16 %v1307, %v1305
  %v1518 = vpack.c.b16 %v1310, %v1308
  %v1519 = vpack.c.b16 %v1311, %v1309
  %v1520 = vpack.c.b16 %v1314, %v1312
  %v1521 = vpack.c.b16 %v1315, %v1313
  %v1522 = vpack.c.b16 %v1318, %v1316
  %v1523 = vpack.c.b16 %v1319, %v1317
  %v1524 = vpack.c.b16 %v1322, %v1320
  %v1525 = vpack.c.b16 %v1323, %v1321
  %v1526 = vpack.c.b16 %v1326, %v1324
  %v1527 = vpack.c.b16 %v1327, %v1325
  %v1528 = vpack.c.b16 %v1330, %v1328
  %v1529 = vpack.c.b16 %v1331, %v1329
  %v1530 = vpack.c.b16 %v1334, %v1332
  %v1531 = vpack.c.b16 %v1335, %v1333
  %v1532 = vpack.c.b16 %v1338, %v1336
  %v1533 = vpack.c.b16 %v1339, %v1337
  %v1534 = vpack.c.b16 %v1342, %v1340
  %v1535 = vpack.c.b16 %v1343, %v1341
  %v1536 = vpack.c.b16 %v1346, %v1344
  %v1537 = vpack.c.b16 %v1347, %v1345
  %v1538 = vpack.c.b16 %v1350, %v1348
  %v1539 = vpack.c.b16 %v1351, %v1349
  %v1540 = vpack.c.b16 %v1354, %v1352
  %v1541 = vpack.c.b16 %v1355, %v1353
  %v1542 = vpack.c.b16 %v1358, %v1356
  %v1543 = vpack.c.b16 %v1359, %v1357
  %v1544 = vpack.c.b16 %v1362, %v1360
  %v1545 = vpack.c.b16 %v1363, %v1361
  %v1546 = vpack.c.b16 %v1366, %v1364
  %v1547 = vpack.c.b16 %v1367, %v1365
  %v1548 = vpack.c.b16 %v1370, %v1368
  %v1549 = vpack.c.b16 %v1371, %v1369
  %v1550 = vpack.c.b16 %v1374, %v1372
  %v1551 = vpack.c.b16 %v1375, %v1373
  %v1552 = vpack.c.b16 %v1378, %v1376
  %v1553 = vpack.c.b16 %v1379, %v1377
  %v1554 = vpack.c.b16 %v1382, %v1380
  %v1555 = vpack.c.b16 %v1383, %v1381
  %v1556 = vpack.c.b16 %v1386, %v1384
  %v1557 = vpack.c.b16 %v1387, %v1385
  %v1558 = vpack.c.b16 %v1390, %v1388
  %v1559 = vpack.c.b16 %v1391, %v1389
  %v1560 = vpack.c.b16 %v1394, %v1392
  %v1561 = vpack.c.b16 %v1395, %v1393
  %v1562 = vpack.c.b16 %v1398, %v1396
  %v1563 = vpack.c.b16 %v1399, %v1397
  %v1564 = vpack.c.b16 %v1402, %v1400
  %v1565 = vpack.c.b16 %v1403, %v1401
  %v1566 = vpack.c.b16 %v1406, %v1404
  %v1567 = vpack.c.b16 %v1407, %v1405
  %v1568 = vpack.c.b16 %v1410, %v1408
  %v1569 = vpack.c.b16 %v1411, %v1409
  %v1570 = vpack.c.b16 %v1414, %v1412
  %v1571 = vpack.c.b16 %v1415, %v1413
  %v1572 = vpack.c.b16 %v1418, %v1416
  %v1573 = vpack.c.b16 %v1419, %v1417
  %v1574 = vpack.c.b16 %v1422, %v1420
  %v1575 = vpack.c.b16 %v1423, %v1421
  %v1576 = vpack.c.b16 %v1426, %v1424
  %v1577 = vpack.c.b16 %v1427, %v1425
  %v1578 = vpack.c.b16 %v1430, %v1428
  %v1579 = vpack.c.b16 %v1431, %v1429
  %v1580 = vpack.c.b16 %v1434, %v1432
  %v1581 = vpack.c.b16 %v1435, %v1433
  %v1582 = vpack.c.b16 %v1438, %v1436
  %v1583 = vpack.c.b16 %v1439, %v1437
  %v1584 = vpack.c.b16 %v1442, %v1440
  %v1585 = vpack.c.b16 %v1443, %v1441
  %v1586 = vpack.c.b16 %v1446, %v1444
  %v1587 = vpack.c.b16 %v1447, %v1445
  %v1588 = vpack.c.b16 %v1450, %v1448
  %v1589 = vpack.c.b16 %v1451, %v1449
  %v1590 = vpack.c.b16 %v1454, %v1452
  %v1591 = vpack.c.b16 %v1455, %v1453
  %v1592 = vpack.c.b16 %v1458, %v1456
  %v1593 = vpack.c.b16 %v1459, %v1457
  %v1594 = vpack.c.b16 %v1462, %v1460
  %v1595 = vpack.c.b16 %v1463, %v1461
  %v1596 = vpack.c.b16 %v1466, %v1464
  %v1597 = vpack.c.b16 %v1467, %v1465
  %v1598 = vpack.c.b16 %v1470, %v1468
  %v1599 = vpack.c.b16 %v1471, %v1469
  %1728 = vmatprep.subr.bf16.mxu0 %v1487
  %1729 = vmatpush1.bf16.msra.mxu0 %v1486
  %1730 = vmatprep.subr.bf16.mxu0 %v1485
  %1731 = vmatpush1.bf16.msra.mxu0 %v1484
  %1732 = vmatprep.subr.bf16.mxu0 %v1483
  %1733 = vmatpush1.bf16.msra.mxu0 %v1482
  %1734 = vmatprep.subr.bf16.mxu0 %v1481
  %1735 = vmatpush1.bf16.msra.mxu0 %v1480
  %1736 = vmatprep.subr.bf16.mxu0 %v1479
  %1737 = vmatpush1.bf16.msra.mxu0 %v1478
  %1738 = vmatprep.subr.bf16.mxu0 %v1477
  %1739 = vmatpush1.bf16.msra.mxu0 %v1476
  %1740 = vmatprep.subr.bf16.mxu0 %v1475
  %1741 = vmatpush1.bf16.msra.mxu0 %v1474
  %1742 = vmatprep.subr.bf16.mxu0 %v1473
  %1743 = vmatpush1.bf16.msra.mxu0 %v1472
  %1744 = vmatprep.subr.bf16.mxu0 %v1503
  %1745 = vmatpush2.bf16.msra.mxu0 %v1502
  %1746 = vmatprep.subr.bf16.mxu0 %v1501
  %1747 = vmatpush2.bf16.msra.mxu0 %v1500
  %1748 = vmatprep.subr.bf16.mxu0 %v1499
  %1749 = vmatpush2.bf16.msra.mxu0 %v1498
  %1750 = vmatprep.subr.bf16.mxu0 %v1497
  %1751 = vmatpush2.bf16.msra.mxu0 %v1496
  %1752 = vmatprep.subr.bf16.mxu0 %v1495
  %1753 = vmatpush2.bf16.msra.mxu0 %v1494
  %1754 = vmatprep.subr.bf16.mxu0 %v1493
  %1755 = vmatpush2.bf16.msra.mxu0 %v1492
  %1756 = vmatprep.subr.bf16.mxu0 %v1491
  %1757 = vmatpush2.bf16.msra.mxu0 %v1490
  %1758 = vmatprep.subr.bf16.mxu0 %v1489
  %1759 = vmatpush2.bf16.msra.mxu0 %v1488
  %1760 = vmatprep.mubr.bf16.mxu0 %v941
  %1761 = vmatmul.mubr.bf16.gmra.mxu0 %v940
  %v1762 = vpop.f32.mrf.mxu0
  %v1763 = vadd.f32 %v1081, %v1762
  %v1764 = vpop.f32.mrf.mxu0
  %v1765 = vadd.f32 %v1085, %v1764
  %v1766 = vpop.f32.mrf.mxu0
  %v1767 = vpop.f32.mrf.mxu0
  %1768 = vdwg.mxu0
  %1769 = vmatprep.subr.bf16.mxu0 %v1519
  %1770 = vmatpush1.bf16.msra.mxu0 %v1518
  %1771 = vmatprep.subr.bf16.mxu0 %v1517
  %1772 = vmatpush1.bf16.msra.mxu0 %v1516
  %1773 = vmatprep.subr.bf16.mxu0 %v1515
  %1774 = vmatpush1.bf16.msra.mxu0 %v1514
  %1775 = vmatprep.subr.bf16.mxu0 %v1513
  %1776 = vmatpush1.bf16.msra.mxu0 %v1512
  %1777 = vmatprep.subr.bf16.mxu0 %v1511
  %1778 = vmatpush1.bf16.msra.mxu0 %v1510
  %1779 = vmatprep.subr.bf16.mxu0 %v1509
  %1780 = vmatpush1.bf16.msra.mxu0 %v1508
  %1781 = vmatprep.subr.bf16.mxu0 %v1507
  %1782 = vmatpush1.bf16.msra.mxu0 %v1506
  %1783 = vmatprep.subr.bf16.mxu0 %v1505
  %1784 = vmatpush1.bf16.msra.mxu0 %v1504
  %1785 = vmatprep.subr.bf16.mxu0 %v1535
  %1786 = vmatpush2.bf16.msra.mxu0 %v1534
  %1787 = vmatprep.subr.bf16.mxu0 %v1533
  %1788 = vmatpush2.bf16.msra.mxu0 %v1532
  %1789 = vmatprep.subr.bf16.mxu0 %v1531
  %1790 = vmatpush2.bf16.msra.mxu0 %v1530
  %1791 = vmatprep.subr.bf16.mxu0 %v1529
  %1792 = vmatpush2.bf16.msra.mxu0 %v1528
  %1793 = vmatprep.subr.bf16.mxu0 %v1527
  %1794 = vmatpush2.bf16.msra.mxu0 %v1526
  %1795 = vmatprep.subr.bf16.mxu0 %v1525
  %1796 = vmatpush2.bf16.msra.mxu0 %v1524
  %1797 = vmatprep.subr.bf16.mxu0 %v1523
  %1798 = vmatpush2.bf16.msra.mxu0 %v1522
  %1799 = vmatprep.subr.bf16.mxu0 %v1521
  %1800 = vmatpush2.bf16.msra.mxu0 %v1520
  %1801 = vmatprep.mubr.bf16.mxu0 %v943
  %1802 = vmatmul.mubr.bf16.gmra.mxu0 %v942
  %v1803 = vpop.f32.mrf.mxu0
  %v1804 = vadd.f32 %v1763, %v1803
  %v1805 = vpop.f32.mrf.mxu0
  %v1806 = vadd.f32 %v1765, %v1805
  %v1807 = vpop.f32.mrf.mxu0
  %v1808 = vpop.f32.mrf.mxu0
  %1809 = vdwg.mxu0
  %1810 = vmatprep.subr.bf16.mxu0 %v1551
  %1811 = vmatpush1.bf16.msra.mxu0 %v1550
  %1812 = vmatprep.subr.bf16.mxu0 %v1549
  %1813 = vmatpush1.bf16.msra.mxu0 %v1548
  %1814 = vmatprep.subr.bf16.mxu0 %v1547
  %1815 = vmatpush1.bf16.msra.mxu0 %v1546
  %1816 = vmatprep.subr.bf16.mxu0 %v1545
  %1817 = vmatpush1.bf16.msra.mxu0 %v1544
  %1818 = vmatprep.subr.bf16.mxu0 %v1543
  %1819 = vmatpush1.bf16.msra.mxu0 %v1542
  %1820 = vmatprep.subr.bf16.mxu0 %v1541
  %1821 = vmatpush1.bf16.msra.mxu0 %v1540
  %1822 = vmatprep.subr.bf16.mxu0 %v1539
  %1823 = vmatpush1.bf16.msra.mxu0 %v1538
  %1824 = vmatprep.subr.bf16.mxu0 %v1537
  %1825 = vmatpush1.bf16.msra.mxu0 %v1536
  %1826 = vmatprep.subr.bf16.mxu0 %v1567
  %1827 = vmatpush2.bf16.msra.mxu0 %v1566
  %1828 = vmatprep.subr.bf16.mxu0 %v1565
  %1829 = vmatpush2.bf16.msra.mxu0 %v1564
  %1830 = vmatprep.subr.bf16.mxu0 %v1563
  %1831 = vmatpush2.bf16.msra.mxu0 %v1562
  %1832 = vmatprep.subr.bf16.mxu0 %v1561
  %1833 = vmatpush2.bf16.msra.mxu0 %v1560
  %1834 = vmatprep.subr.bf16.mxu0 %v1559
  %1835 = vmatpush2.bf16.msra.mxu0 %v1558
  %1836 = vmatprep.subr.bf16.mxu0 %v1557
  %1837 = vmatpush2.bf16.msra.mxu0 %v1556
  %1838 = vmatprep.subr.bf16.mxu0 %v1555
  %1839 = vmatpush2.bf16.msra.mxu0 %v1554
  %1840 = vmatprep.subr.bf16.mxu0 %v1553
  %1841 = vmatpush2.bf16.msra.mxu0 %v1552
  %1842 = vmatprep.mubr.bf16.mxu0 %v945
  %1843 = vmatmul.mubr.bf16.gmra.mxu0 %v944
  %v1844 = vpop.f32.mrf.mxu0
  %v1845 = vadd.f32 %v1804, %v1844
  %v1846 = vpop.f32.mrf.mxu0
  %v1847 = vadd.f32 %v1806, %v1846
  %v1848 = vpop.f32.mrf.mxu0
  %v1849 = vpop.f32.mrf.mxu0
  %1850 = vdwg.mxu0
  %1851 = vmatprep.subr.bf16.mxu0 %v1583
  %1852 = vmatpush1.bf16.msra.mxu0 %v1582
  %1853 = vmatprep.subr.bf16.mxu0 %v1581
  %1854 = vmatpush1.bf16.msra.mxu0 %v1580
  %1855 = vmatprep.subr.bf16.mxu0 %v1579
  %1856 = vmatpush1.bf16.msra.mxu0 %v1578
  %1857 = vmatprep.subr.bf16.mxu0 %v1577
  %1858 = vmatpush1.bf16.msra.mxu0 %v1576
  %1859 = vmatprep.subr.bf16.mxu0 %v1575
  %1860 = vmatpush1.bf16.msra.mxu0 %v1574
  %1861 = vmatprep.subr.bf16.mxu0 %v1573
  %1862 = vmatpush1.bf16.msra.mxu0 %v1572
  %1863 = vmatprep.subr.bf16.mxu0 %v1571
  %1864 = vmatpush1.bf16.msra.mxu0 %v1570
  %1865 = vmatprep.subr.bf16.mxu0 %v1569
  %1866 = vmatpush1.bf16.msra.mxu0 %v1568
  %1867 = vmatprep.subr.bf16.mxu0 %v1599
  %1868 = vmatpush2.bf16.msra.mxu0 %v1598
  %1869 = vmatprep.subr.bf16.mxu0 %v1597
  %1870 = vmatpush2.bf16.msra.mxu0 %v1596
  %1871 = vmatprep.subr.bf16.mxu0 %v1595
  %1872 = vmatpush2.bf16.msra.mxu0 %v1594
  %1873 = vmatprep.subr.bf16.mxu0 %v1593
  %1874 = vmatpush2.bf16.msra.mxu0 %v1592
  %1875 = vmatprep.subr.bf16.mxu0 %v1591
  %1876 = vmatpush2.bf16.msra.mxu0 %v1590
  %1877 = vmatprep.subr.bf16.mxu0 %v1589
  %1878 = vmatpush2.bf16.msra.mxu0 %v1588
  %1879 = vmatprep.subr.bf16.mxu0 %v1587
  %1880 = vmatpush2.bf16.msra.mxu0 %v1586
  %1881 = vmatprep.subr.bf16.mxu0 %v1585
  %1882 = vmatpush2.bf16.msra.mxu0 %v1584
  %1883 = vmatprep.mubr.bf16.mxu0 %v947
  %1884 = vmatmul.mubr.bf16.gmra.mxu0 %v946
  %v1885 = vpop.f32.mrf.mxu0
  %v1886 = vadd.f32 %v1845, %v1885
  %v1887 = vpop.f32.mrf.mxu0
  %v1888 = vadd.f32 %v1847, %v1887
  %v1889 = vpop.f32.mrf.mxu0
  %v1890 = vpop.f32.mrf.mxu0
  %1891 = vdwg.mxu0
  %vm1892 = vcmp.gt.f32.partialorder %v1886, 0.0
  %vm1893 = vcmp.gt.f32.partialorder %v1888, 0.0
  %v1894 = vmul.f32 %v1886, 0.2
  %v1895 = vmul.f32 %v1888, 0.2
  %v1896 = vsel %vm1892, %v1886, %v1894
  %v1897 = vsel %vm1893, %v1888, %v1895
  %v1898 = vld [vmem:[%s12] sm:$0xff]
  %v1899 = vld [vmem:[%s12 + $0x8] sm:$0xff]
  %v1900 = vld [vmem:[%s12 + $0x10] sm:$0xff]
  %v1901 = vld [vmem:[%s12 + $0x18] sm:$0xff]
  %v1902 = vld [vmem:[%s12 + $0x20] sm:$0xff]
  %v1903 = vld [vmem:[%s12 + $0x28] sm:$0xff]
  %v1904 = vld [vmem:[%s12 + $0x30] sm:$0xff]
  %v1905 = vld [vmem:[%s12 + $0x38] sm:$0xff]
  %v1906 = vld [vmem:[%s12 + $0x40] sm:$0xff]
  %v1907 = vld [vmem:[%s12 + $0x48] sm:$0xff]
  %v1908 = vld [vmem:[%s12 + $0x50] sm:$0xff]
  %v1909 = vld [vmem:[%s12 + $0x58] sm:$0xff]
  %v1910 = vld [vmem:[%s12 + $0x60] sm:$0xff]
  %v1911 = vld [vmem:[%s12 + $0x68] sm:$0xff]
  %v1912 = vld [vmem:[%s12 + $0x70] sm:$0xff]
  %v1913 = vld [vmem:[%s12 + $0x78] sm:$0xff]
  %v1914 = vld [vmem:[%s12 + $0x80] sm:$0xff]
  %v1915 = vld [vmem:[%s12 + $0x88] sm:$0xff]
  %v1916 = vld [vmem:[%s12 + $0x90] sm:$0xff]
  %v1917 = vld [vmem:[%s12 + $0x98] sm:$0xff]
  %v1918 = vld [vmem:[%s12 + $0xa0] sm:$0xff]
  %v1919 = vld [vmem:[%s12 + $0xa8] sm:$0xff]
  %v1920 = vld [vmem:[%s12 + $0xb0] sm:$0xff]
  %v1921 = vld [vmem:[%s12 + $0xb8] sm:$0xff]
  %v1922 = vld [vmem:[%s12 + $0xc0] sm:$0xff]
  %v1923 = vld [vmem:[%s12 + $0xc8] sm:$0xff]
  %v1924 = vld [vmem:[%s12 + $0xd0] sm:$0xff]
  %v1925 = vld [vmem:[%s12 + $0xd8] sm:$0xff]
  %v1926 = vld [vmem:[%s12 + $0xe0] sm:$0xff]
  %v1927 = vld [vmem:[%s12 + $0xe8] sm:$0xff]
  %v1928 = vld [vmem:[%s12 + $0xf0] sm:$0xff]
  %v1929 = vld [vmem:[%s12 + $0xf8] sm:$0xff]
  %v1930 = vld [vmem:[#allocation4] sm:$0x1]
  %v1932 = vlaneseq
  %v1933 = vshrl.u32 %v1932, 7
  %v1934 = vsub.s32 0, %v1933
  %v1935 = vrot.slane %v1930, %v1934
  %1937 = vmatprep.subr.mxu0 0.0
  %1938 = vmatpush1.msra.mxu0 %v1913
  %1939 = vmatprep.subr.mxu0 0.0
  %1940 = vmatpush1.msra.mxu0 %v1912
  %1941 = vmatprep.subr.mxu0 0.0
  %1942 = vmatpush1.msra.mxu0 %v1911
  %1943 = vmatprep.subr.mxu0 0.0
  %1944 = vmatpush1.msra.mxu0 %v1910
  %1945 = vmatprep.subr.mxu0 0.0
  %1946 = vmatpush1.msra.mxu0 %v1909
  %1947 = vmatprep.subr.mxu0 0.0
  %1948 = vmatpush1.msra.mxu0 %v1908
  %1949 = vmatprep.subr.mxu0 0.0
  %1950 = vmatpush1.msra.mxu0 %v1907
  %1951 = vmatprep.subr.mxu0 0.0
  %1952 = vmatpush1.msra.mxu0 %v1906
  %1953 = vmatprep.subr.mxu0 0.0
  %1954 = vmatpush1.msra.mxu0 %v1905
  %1955 = vmatprep.subr.mxu0 0.0
  %1956 = vmatpush1.msra.mxu0 %v1904
  %1957 = vmatprep.subr.mxu0 0.0
  %1958 = vmatpush1.msra.mxu0 %v1903
  %1959 = vmatprep.subr.mxu0 0.0
  %1960 = vmatpush1.msra.mxu0 %v1902
  %1961 = vmatprep.subr.mxu0 0.0
  %1962 = vmatpush1.msra.mxu0 %v1901
  %1963 = vmatprep.subr.mxu0 0.0
  %1964 = vmatpush1.msra.mxu0 %v1900
  %1965 = vmatprep.subr.mxu0 0.0
  %1966 = vmatpush1.msra.mxu0 %v1899
  %1967 = vmatprep.subr.mxu0 0.0
  %1968 = vmatpush1.msra.mxu0 %v1898
  %1969 = vmatprep.subr.mxu0 0.0
  %1970 = vmatpush2.msra.mxu0 %v1929
  %1971 = vmatprep.subr.mxu0 0.0
  %1972 = vmatpush2.msra.mxu0 %v1928
  %1973 = vmatprep.subr.mxu0 0.0
  %1974 = vmatpush2.msra.mxu0 %v1927
  %1975 = vmatprep.subr.mxu0 0.0
  %1976 = vmatpush2.msra.mxu0 %v1926
  %1977 = vmatprep.subr.mxu0 0.0
  %1978 = vmatpush2.msra.mxu0 %v1925
  %1979 = vmatprep.subr.mxu0 0.0
  %1980 = vmatpush2.msra.mxu0 %v1924
  %1981 = vmatprep.subr.mxu0 0.0
  %1982 = vmatpush2.msra.mxu0 %v1923
  %1983 = vmatprep.subr.mxu0 0.0
  %1984 = vmatpush2.msra.mxu0 %v1922
  %1985 = vmatprep.subr.mxu0 0.0
  %1986 = vmatpush2.msra.mxu0 %v1921
  %1987 = vmatprep.subr.mxu0 0.0
  %1988 = vmatpush2.msra.mxu0 %v1920
  %1989 = vmatprep.subr.mxu0 0.0
  %1990 = vmatpush2.msra.mxu0 %v1919
  %1991 = vmatprep.subr.mxu0 0.0
  %1992 = vmatpush2.msra.mxu0 %v1918
  %1993 = vmatprep.subr.mxu0 0.0
  %1994 = vmatpush2.msra.mxu0 %v1917
  %1995 = vmatprep.subr.mxu0 0.0
  %1996 = vmatpush2.msra.mxu0 %v1916
  %1997 = vmatprep.subr.mxu0 0.0
  %1998 = vmatpush2.msra.mxu0 %v1915
  %1999 = vmatprep.subr.mxu0 0.0
  %2000 = vmatpush2.msra.mxu0 %v1914
  %2001 = vmatprep.mubr.f32.mxu0 %v1897
  %2002 = vmatmul.mubr.f32.gmra.mxu0 %v1896
  %v2003 = vpop.f32.mrf.mxu0
  %v2004 = vadd.f32 %v1935, %v2003
  %v2005 = vpop.f32.mrf.mxu0
  %2006 = vdwg.mxu0
  %vm2007 = vcmask 1024
  %2008 = vst.msk [vmem:[%s14] sm:$0x3] %vm2007, %v2004
  // Predicated region
  $region58: #{tpu_custom_call.1} parent=0 // pred_check
    _
  $region59: #{tpu_custom_call.1} parent=0 // pred_check_branch
    %2010 = sbr.rel (0) target = $region61
  $region60: #{tpu_custom_call.1} parent=0 // pred_region
    _
  $region61: #{tpu_custom_call.1} parent=0 // pred_fallthru
    _
  // Predicated region
  $region62: #{tpu_custom_call.1} parent=0 // pred_check
    _
  $region63: #{tpu_custom_call.1} parent=0 // pred_check_branch
    %2012 = sbr.rel (0) target = $region65
  $region64: #{tpu_custom_call.1} parent=0 // pred_region
    _
  $region65: #{tpu_custom_call.1} parent=0 // pred_fallthru
    _
  %2013 = vsyncmov [#allocation3]
  %s2014 = vpop.sfrf %2013
  %p2015 = scmp.eq.s32.totalorder %s2014, 0
  %p2016 = pneg %p2015
  %2018 = shalt.err (%p2016)

</llo_original>
